<compile_context>
chip_gen: v7x
topology: tpu7x:2x2x1
jax: 0.10.0
libtpu: 0.0.40
codegen_flags: <defaults>
</compile_context>

<pallas_src>
import jax
import jax.numpy as jnp
from jax.experimental import pallas as pl
from jax.experimental.pallas import tpu as pltpu

IMG_SHAPE = (3, 32, 32)
IN_FEATURES = IMG_SHAPE[0] * IMG_SHAPE[1] * IMG_SHAPE[2]  # 3072
H1 = 512
H2 = 256

MAX_TB = 512      # largest batch tile (fits comfortably in v7x's 64 MiB VMEM)
MIN_SPLIT = 256   # batches >= this get >= 2 tiles (v7x megacore utilization)
TK = 768          # K chunk for the n_b == 1 tiny-batch latency path (4 steps)


def _round_up(x, m):
    return ((x + m - 1) // m) * m


def _leaky_relu(x, slope=0.2):
    return jnp.where(x > 0, x, slope * x)


def _sigmoid(x):
    # Numerically stable, exact sigmoid (exp rides the EUP slot).
    e = jnp.exp(-jnp.abs(x))
    return jnp.where(x >= 0, 1.0 / (1.0 + e), e / (1.0 + e))


# ---------------------------------------------------------------------------
# Throughput kernel (n_b > 1): full-K, W1 resident, straight-through body.
# ---------------------------------------------------------------------------
def _disc_kernel_fullk(x_ref, w1_ref, b1_ref, w2_ref, b2_ref, w3_ref, b3_ref,
                       o_ref):
    # x_ref: (tb, 3072) bf16   w1_ref: (3072, 512) bf16   b1_ref: (1, 512) f32
    # w2_ref: (512, 256) bf16  b2_ref: (1, 256) f32
    # w3_ref: (1, 256) f32     b3_ref: (1, 1) f32          o_ref: (tb, 1) f32
    h1 = jnp.dot(x_ref[...], w1_ref[...], preferred_element_type=jnp.float32)
    h1 = _leaky_relu(h1 + b1_ref[...])
    h2 = jnp.dot(h1.astype(jnp.bfloat16), w2_ref[...],
                 preferred_element_type=jnp.float32)
    h2 = _leaky_relu(h2 + b2_ref[...])
    # Final 256 -> 1 layer as a lane reduction (XLU), not an N=1 MXU matmul.
    logits = jnp.sum(h2 * w3_ref[...], axis=-1, keepdims=True) + b3_ref[...]
    o_ref[...] = _sigmoid(logits)


# ---------------------------------------------------------------------------
# Latency kernel (n_b == 1): split the 3072-wide reduction so the W1 DMA is
# pipelined against compute instead of fully exposed up front.
# ---------------------------------------------------------------------------
def _disc_kernel_ksplit(x_ref, w1_ref, b1_ref, w2_ref, b2_ref, w3_ref, b3_ref,
                        o_ref, acc_ref):
    k = pl.program_id(1)

    @pl.when(k == 0)
    def _():
        acc_ref[...] = jnp.zeros_like(acc_ref)

    acc_ref[...] += jnp.dot(x_ref[...], w1_ref[...],
                            preferred_element_type=jnp.float32)

    @pl.when(k == pl.num_programs(1) - 1)
    def _():
        h1 = _leaky_relu(acc_ref[...] + b1_ref[...])
        h2 = jnp.dot(h1.astype(jnp.bfloat16), w2_ref[...],
                     preferred_element_type=jnp.float32)
        h2 = _leaky_relu(h2 + b2_ref[...])
        logits = jnp.sum(h2 * w3_ref[...], axis=-1, keepdims=True) + b3_ref[...]
        o_ref[...] = _sigmoid(logits)


def discriminator_forward(img, params):
    """img: (B, 3, 32, 32) float32 NCHW -> validity (B, 1) float32."""
    w1, b1, w2, b2, w3, b3 = params
    batch = img.shape[0]
    # Flatten (== torch .view). Feed x as bf16: the matmul consumes bf16
    # anyway, so streaming f32 x would waste half the HBM bandwidth.
    # (Ideally the producer keeps activations in bf16 so this cast fuses away.)
    x = img.reshape(batch, -1).astype(jnp.bfloat16)

    # Batch tiling: multiple of 8 sublanes; >= 2 tiles for mid/large batches so
    # the "parallel" axis feeds both v7x TensorCores; capped at MAX_TB.
    b8 = _round_up(max(batch, 8), 8)
    n_b = -(-b8 // MAX_TB)
    if n_b == 1 and b8 >= MIN_SPLIT:
        n_b = 2
    tb = _round_up(-(-b8 // n_b), 8)
    b_pad = n_b * tb
    if b_pad != batch:
        x = jnp.pad(x, ((0, b_pad - batch), (0, 0)))

    common = dict(
        out_shape=jax.ShapeDtypeStruct((b_pad, 1), jnp.float32),
    )

    if n_b > 1:
        # Throughput path: W1 fully VMEM-resident, fetched from HBM once.
        out = pl.pallas_call(
            _disc_kernel_fullk,
            grid=(n_b,),
            in_specs=[
                pl.BlockSpec((tb, IN_FEATURES), lambda i: (i, 0)),   # x (bf16)
                pl.BlockSpec((IN_FEATURES, H1), lambda i: (0, 0)),   # w1 resident
                pl.BlockSpec((1, H1), lambda i: (0, 0)),             # b1
                pl.BlockSpec((H1, H2), lambda i: (0, 0)),            # w2 resident
                pl.BlockSpec((1, H2), lambda i: (0, 0)),             # b2
                pl.BlockSpec((1, H2), lambda i: (0, 0)),             # w3 (lane-dense)
                pl.BlockSpec((1, 1), lambda i: (0, 0)),              # b3
            ],
            out_specs=pl.BlockSpec((tb, 1), lambda i: (i, 0)),
            compiler_params=pltpu.CompilerParams(
                dimension_semantics=("parallel",),
                vmem_limit_bytes=32 << 20,
            ),
            **common,
        )(x, w1, b1, w2, b2, w3, b3)
    else:
        # Tiny-batch latency path: pipeline the W1 fetch over a K-split.
        n_k = IN_FEATURES // TK
        out = pl.pallas_call(
            _disc_kernel_ksplit,
            grid=(1, n_k),
            in_specs=[
                pl.BlockSpec((tb, TK), lambda i, k: (i, k)),         # x (bf16)
                pl.BlockSpec((TK, H1), lambda i, k: (k, 0)),         # w1 (K tiled)
                pl.BlockSpec((1, H1), lambda i, k: (0, 0)),          # b1
                pl.BlockSpec((H1, H2), lambda i, k: (0, 0)),         # w2
                pl.BlockSpec((1, H2), lambda i, k: (0, 0)),          # b2
                pl.BlockSpec((1, H2), lambda i, k: (0, 0)),          # w3
                pl.BlockSpec((1, 1), lambda i, k: (0, 0)),           # b3
            ],
            out_specs=pl.BlockSpec((tb, 1), lambda i, k: (i, 0)),
            scratch_shapes=[pltpu.VMEM((tb, H1), jnp.float32)],
            compiler_params=pltpu.CompilerParams(
                dimension_semantics=("parallel", "arbitrary"),
                vmem_limit_bytes=32 << 20,
            ),
            **common,
        )(x, w1, b1, w2, b2, w3, b3)

    return out[:batch]


def init_params(key):
    """Deterministic init mimicking torch.nn.Linear defaults
    (U[-1/sqrt(fan_in), 1/sqrt(fan_in)]); W1/W2 stored in bf16."""
    ks = jax.random.split(key, 6)

    def lin(kw, kb, fan_in, fan_out):
        bound = 1.0 / jnp.sqrt(fan_in)
        w = jax.random.uniform(kw, (fan_in, fan_out), jnp.float32, -bound, bound)
        b = jax.random.uniform(kb, (1, fan_out), jnp.float32, -bound, bound)
        return w, b

    w1, b1 = lin(ks[0], ks[1], IN_FEATURES, H1)
    w2, b2 = lin(ks[2], ks[3], H1, H2)
    w3_full, b3 = lin(ks[4], ks[5], H2, 1)        # (256, 1), (1, 1)
    w3 = w3_full.reshape(1, H2)                    # lane-dense final layer
    return (w1.astype(jnp.bfloat16), b1,
            w2.astype(jnp.bfloat16), b2,
            w3, b3)


def _reference_forward_bf16(img, params):
    """Plain-JAX reference doing the same bf16-matmul / f32-accumulate math."""
    w1, b1, w2, b2, w3, b3 = params
    x = img.reshape(img.shape[0], -1).astype(jnp.bfloat16)
    h1 = jnp.dot(x, w1, preferred_element_type=jnp.float32) + b1
    h1 = jnp.where(h1 > 0, h1, 0.2 * h1)
    h2 = jnp.dot(h1.astype(jnp.bfloat16), w2,
                 preferred_element_type=jnp.float32) + b2
    h2 = jnp.where(h2 > 0, h2, 0.2 * h2)
    logits = h2 @ w3.reshape(H2, 1) + b3
    return jax.nn.sigmoid(logits)


def _reference_forward_f32(img, params):
    """Full-f32 reference (torch-like math with the same weight values)."""
    w1, b1, w2, b2, w3, b3 = params
    x = img.reshape(img.shape[0], -1).astype(jnp.float32)
    h1 = x @ w1.astype(jnp.float32) + b1
    h1 = jnp.where(h1 > 0, h1, 0.2 * h1)
    h2 = h1 @ w2.astype(jnp.float32) + b2
    h2 = jnp.where(h2 > 0, h2, 0.2 * h2)
    logits = h2 @ w3.reshape(H2, 1) + b3
    return jax.nn.sigmoid(logits)


if __name__ == "__main__":
    key = jax.random.PRNGKey(0)
    k_img, k_params = jax.random.split(key)
    params = init_params(k_params)

    # 1) Small batch -> n_b == 1 -> K-split latency kernel.
    batch = 2
    img = jax.random.normal(k_img, (batch, *IMG_SHAPE), dtype=jnp.float32)
    out = jax.block_until_ready(discriminator_forward(img, params))
    assert out.shape == (batch, 1)
    ref = _reference_forward_bf16(img, params)
    assert jnp.allclose(out, ref, atol=2e-3, rtol=2e-3), (out, ref)
    ref32 = _reference_forward_f32(img, params)
    assert jnp.allclose(out, ref32, atol=2e-2, rtol=2e-2), (out, ref32)

    # 2) Mid-size batch -> n_b == 2 -> full-K resident-W1 throughput kernel
    #    (also exercises the megacore batch split).
    batch2 = 384
    img2 = jax.random.normal(k_img, (batch2, *IMG_SHAPE), dtype=jnp.float32)
    out2 = jax.block_until_ready(discriminator_forward(img2, params))
    assert out2.shape == (batch2, 1)
    ref2 = _reference_forward_bf16(img2, params)
    assert jnp.allclose(out2, ref2, atol=2e-3, rtol=2e-3), (out2, ref2)

    print("KERNEL_OK")
</pallas_src>

<mosaic_0001>
module attributes {stable_mosaic.version = 11 : i64} {
  func.func @_disc_kernel_ksplit(%arg0: i32, %arg1: i32, %arg2: memref<8x768xbf16, #tpu.memory_space<vmem>>, %arg3: memref<768x512xbf16, #tpu.memory_space<vmem>>, %arg4: memref<1x512xf32, #tpu.memory_space<vmem>>, %arg5: memref<512x256xbf16, #tpu.memory_space<vmem>>, %arg6: memref<1x256xf32, #tpu.memory_space<vmem>>, %arg7: memref<1x256xf32, #tpu.memory_space<vmem>>, %arg8: memref<1x1xf32, #tpu.memory_space<vmem>>, %arg9: memref<8x1xf32, #tpu.memory_space<vmem>>, %arg10: memref<8x512xf32, #tpu.memory_space<vmem>>) attributes {dimension_semantics = [#tpu.dimension_semantics<parallel>, #tpu.dimension_semantics<arbitrary>], iteration_bounds = array<i64: 1, 4>, scalar_prefetch = 0 : i64, scratch_operands = 1 : i64, tpu.core_type = #tpu.core_type<tc>, window_params = [{transform_indices = @transform_0, window_bounds = array<i64: 8, 768>}, {transform_indices = @transform_1, window_bounds = array<i64: 768, 512>}, {pipeline_mode = #tpu.pipeline_mode<synchronous>, transform_indices = @transform_2, window_bounds = array<i64: 1, 512>}, {pipeline_mode = #tpu.pipeline_mode<synchronous>, transform_indices = @transform_3, window_bounds = array<i64: 512, 256>}, {pipeline_mode = #tpu.pipeline_mode<synchronous>, transform_indices = @transform_4, window_bounds = array<i64: 1, 256>}, {pipeline_mode = #tpu.pipeline_mode<synchronous>, transform_indices = @transform_5, window_bounds = array<i64: 1, 256>}, {pipeline_mode = #tpu.pipeline_mode<synchronous>, transform_indices = @transform_6, window_bounds = array<i64: 1, 1>}, {transform_indices = @transform_7, window_bounds = array<i64: 8, 1>}]} {
    %c0_i32 = arith.constant 0 : i32
    %0 = arith.cmpi eq, %arg1, %c0_i32 : i32
    %1 = arith.extui %0 : i1 to i32
    %c0_i32_0 = arith.constant 0 : i32
    %2 = arith.cmpi ne, %1, %c0_i32_0 : i32
    scf.if %2 {
      %cst_9 = arith.constant 0.000000e+00 : f32
      %12 = vector.broadcast %cst_9 : f32 to vector<8x512xf32>
      %c0_10 = arith.constant 0 : index
      %c0_11 = arith.constant 0 : index
      %13 = vector.load %arg10[%c0_10, %c0_11] : memref<8x512xf32, #tpu.memory_space<vmem>>, vector<8x512xf32>
      tpu.vector_store %arg10[%c0_10, %c0_11], %12 {strides = array<i32>} : memref<8x512xf32, #tpu.memory_space<vmem>>, vector<8x512xf32>,
    } else {
    }
    %c0 = arith.constant 0 : index
    %c0_1 = arith.constant 0 : index
    %3 = vector.load %arg10[%c0, %c0_1] : memref<8x512xf32, #tpu.memory_space<vmem>>, vector<8x512xf32>
    %c0_2 = arith.constant 0 : index
    %c0_3 = arith.constant 0 : index
    %4 = vector.load %arg2[%c0_2, %c0_3] : memref<8x768xbf16, #tpu.memory_space<vmem>>, vector<8x768xbf16>
    %c0_4 = arith.constant 0 : index
    %c0_5 = arith.constant 0 : index
    %5 = vector.load %arg3[%c0_4, %c0_5] : memref<768x512xbf16, #tpu.memory_space<vmem>>, vector<768x512xbf16>
    %cst = arith.constant dense<0.000000e+00> : vector<8x512xf32>
    %6 = tpu.matmul %4, %5, %cst {dimension_numbers = #tpu.dot_dimension_numbers<[1], [0], [0], [1], [0, 0, 1, 1], [], []>} : vector<8x768xbf16>, vector<768x512xbf16>, vector<8x512xf32> -> vector<8x512xf32>
    %7 = arith.addf %3, %6 : vector<8x512xf32>
    %c0_6 = arith.constant 0 : index
    %c0_7 = arith.constant 0 : index
    %8 = vector.load %arg10[%c0_6, %c0_7] : memref<8x512xf32, #tpu.memory_space<vmem>>, vector<8x512xf32>
    tpu.vector_store %arg10[%c0_6, %c0_7], %7 {strides = array<i32>} : memref<8x512xf32, #tpu.memory_space<vmem>>, vector<8x512xf32>,
    %c3_i32 = arith.constant 3 : i32
    %9 = arith.cmpi eq, %arg1, %c3_i32 : i32
    %10 = arith.extui %9 : i1 to i32
    %c0_i32_8 = arith.constant 0 : i32
    %11 = arith.cmpi ne, %10, %c0_i32_8 : i32
    scf.if %11 {
      %c0_9 = arith.constant 0 : index
      %c0_10 = arith.constant 0 : index
      %12 = vector.load %arg10[%c0_9, %c0_10] : memref<8x512xf32, #tpu.memory_space<vmem>>, vector<8x512xf32>
      %c0_11 = arith.constant 0 : index
      %c0_12 = arith.constant 0 : index
      %13 = vector.load %arg4[%c0_11, %c0_12] : memref<1x512xf32, #tpu.memory_space<vmem>>, vector<1x512xf32>
      %14 = vector.broadcast %13 : vector<1x512xf32> to vector<8x512xf32>
      %15 = arith.addf %12, %14 : vector<8x512xf32>
      %cst_13 = arith.constant 0.000000e+00 : f32
      %16 = vector.broadcast %cst_13 : f32 to vector<8x512xf32>
      %17 = arith.cmpf ogt, %15, %16 : vector<8x512xf32>
      %cst_14 = arith.constant 2.000000e-01 : f32
      %18 = vector.broadcast %cst_14 : f32 to vector<8x512xf32>
      %19 = arith.mulf %18, %15 : vector<8x512xf32>
      %20 = arith.select %17, %15, %19 : vector<8x512xi1>, vector<8x512xf32>
      %21 = arith.truncf %20 : vector<8x512xf32> to vector<8x512xbf16>
      %c0_15 = arith.constant 0 : index
      %c0_16 = arith.constant 0 : index
      %22 = vector.load %arg5[%c0_15, %c0_16] : memref<512x256xbf16, #tpu.memory_space<vmem>>, vector<512x256xbf16>
      %cst_17 = arith.constant dense<0.000000e+00> : vector<8x256xf32>
      %23 = tpu.matmul %21, %22, %cst_17 {dimension_numbers = #tpu.dot_dimension_numbers<[1], [0], [0], [1], [0, 0, 1, 1], [], []>} : vector<8x512xbf16>, vector<512x256xbf16>, vector<8x256xf32> -> vector<8x256xf32>
      %c0_18 = arith.constant 0 : index
      %c0_19 = arith.constant 0 : index
      %24 = vector.load %arg6[%c0_18, %c0_19] : memref<1x256xf32, #tpu.memory_space<vmem>>, vector<1x256xf32>
      %25 = vector.broadcast %24 : vector<1x256xf32> to vector<8x256xf32>
      %26 = arith.addf %23, %25 : vector<8x256xf32>
      %cst_20 = arith.constant 0.000000e+00 : f32
      %27 = vector.broadcast %cst_20 : f32 to vector<8x256xf32>
      %28 = arith.cmpf ogt, %26, %27 : vector<8x256xf32>
      %cst_21 = arith.constant 2.000000e-01 : f32
      %29 = vector.broadcast %cst_21 : f32 to vector<8x256xf32>
      %30 = arith.mulf %29, %26 : vector<8x256xf32>
      %31 = arith.select %28, %26, %30 : vector<8x256xi1>, vector<8x256xf32>
      %c0_22 = arith.constant 0 : index
      %c0_23 = arith.constant 0 : index
      %32 = vector.load %arg7[%c0_22, %c0_23] : memref<1x256xf32, #tpu.memory_space<vmem>>, vector<1x256xf32>
      %33 = vector.broadcast %32 : vector<1x256xf32> to vector<8x256xf32>
      %34 = arith.mulf %31, %33 : vector<8x256xf32>
      %cst_24 = arith.constant dense<0.000000e+00> : vector<8xf32>
      %35 = vector.multi_reduction <add>, %34, %cst_24 [1] : vector<8x256xf32> to vector<8xf32>
      %36 = vector.shape_cast %35 : vector<8xf32> to vector<8x1xf32>
      %c0_25 = arith.constant 0 : index
      %c0_26 = arith.constant 0 : index
      %37 = vector.load %arg8[%c0_25, %c0_26] : memref<1x1xf32, #tpu.memory_space<vmem>>, vector<1x1xf32>
      %38 = vector.broadcast %37 : vector<1x1xf32> to vector<8x1xf32>
      %39 = arith.addf %36, %38 : vector<8x1xf32>
      %40 = math.absf %39 : vector<8x1xf32>
      %cst_27 = arith.constant 0.000000e+00 : f32
      %41 = vector.broadcast %cst_27 : f32 to vector<8x1xf32>
      %42 = arith.subf %41, %40 : vector<8x1xf32>
      %43 = math.exp %42 : vector<8x1xf32>
      %cst_28 = arith.constant 0.000000e+00 : f32
      %44 = vector.broadcast %cst_28 : f32 to vector<8x1xf32>
      %45 = arith.cmpf oge, %39, %44 : vector<8x1xf32>
      %cst_29 = arith.constant 1.000000e+00 : f32
      %46 = vector.broadcast %cst_29 : f32 to vector<8x1xf32>
      %47 = arith.addf %46, %43 : vector<8x1xf32>
      %cst_30 = arith.constant 1.000000e+00 : f32
      %48 = vector.broadcast %cst_30 : f32 to vector<8x1xf32>
      %49 = arith.divf %48, %47 : vector<8x1xf32>
      %cst_31 = arith.constant 1.000000e+00 : f32
      %50 = vector.broadcast %cst_31 : f32 to vector<8x1xf32>
      %51 = arith.addf %50, %43 : vector<8x1xf32>
      %52 = arith.divf %43, %51 : vector<8x1xf32>
      %53 = arith.select %45, %49, %52 : vector<8x1xi1>, vector<8x1xf32>
      %c0_32 = arith.constant 0 : index
      %c0_33 = arith.constant 0 : index
      %54 = vector.load %arg9[%c0_32, %c0_33] : memref<8x1xf32, #tpu.memory_space<vmem>>, vector<8x1xf32>
      tpu.vector_store %arg9[%c0_32, %c0_33], %53 {strides = array<i32>} : memref<8x1xf32, #tpu.memory_space<vmem>>, vector<8x1xf32>,
    } else {
    }
    return
  }
  func.func @transform_0(%arg0: i32, %arg1: i32) -> (i32, i32) {
    %c0_i32 = arith.constant 0 : i32
    return %arg0, %arg1 : i32, i32
  }
  func.func @transform_1(%arg0: i32, %arg1: i32) -> (i32, i32) {
    %c0_i32 = arith.constant 0 : i32
    %c0_i32_0 = arith.constant 0 : i32
    return %arg1, %c0_i32 : i32, i32
  }
  func.func @transform_2(%arg0: i32, %arg1: i32) -> (i32, i32) {
    %c0_i32 = arith.constant 0 : i32
    %c0_i32_0 = arith.constant 0 : i32
    %c0_i32_1 = arith.constant 0 : i32
    return %c0_i32, %c0_i32_0 : i32, i32
  }
  func.func @transform_3(%arg0: i32, %arg1: i32) -> (i32, i32) {
    %c0_i32 = arith.constant 0 : i32
    %c0_i32_0 = arith.constant 0 : i32
    %c0_i32_1 = arith.constant 0 : i32
    return %c0_i32, %c0_i32_0 : i32, i32
  }
  func.func @transform_4(%arg0: i32, %arg1: i32) -> (i32, i32) {
    %c0_i32 = arith.constant 0 : i32
    %c0_i32_0 = arith.constant 0 : i32
    %c0_i32_1 = arith.constant 0 : i32
    return %c0_i32, %c0_i32_0 : i32, i32
  }
  func.func @transform_5(%arg0: i32, %arg1: i32) -> (i32, i32) {
    %c0_i32 = arith.constant 0 : i32
    %c0_i32_0 = arith.constant 0 : i32
    %c0_i32_1 = arith.constant 0 : i32
    return %c0_i32, %c0_i32_0 : i32, i32
  }
  func.func @transform_6(%arg0: i32, %arg1: i32) -> (i32, i32) {
    %c0_i32 = arith.constant 0 : i32
    %c0_i32_0 = arith.constant 0 : i32
    %c0_i32_1 = arith.constant 0 : i32
    return %c0_i32, %c0_i32_0 : i32, i32
  }
  func.func @transform_7(%arg0: i32, %arg1: i32) -> (i32, i32) {
    %c0_i32 = arith.constant 0 : i32
    %c0_i32_0 = arith.constant 0 : i32
    return %arg0, %c0_i32 : i32, i32
  }
}

</mosaic_0001>

<llo_original>
// kernel: tpu_custom_call.1
$region0: #{tpu_custom_call.1}
  #allocation0 [shape = 'u32[]', space=smem, size = 0x4, offset = 0x4, fixed_abs, tag = 'smem constant byte address 0x4 - core index']
  #allocation1 [shape = 'u32[144,128]{1,0:T(1,128)}', space=vmem, size = 0x12000, scoped, tag = 'internal scratch']
  #allocation2 [shape = 'f32[8,512]{1,0:T(8,128)}', space=vmem, size = 0x4000, scoped, tag = 'scratch operand']
  #allocation3 [shape = 'f32[1,1]{1,0:T(1,128)S(1)}', space=vmem, size = 0x200, scoped, tag = 'scoped memory for tpu_custom_call.1']
  %s0 = inlined_call_operand.hbm [shape: bf16[8,3072], index: 0, kind: input, shape index: {}]
  %s1 = inlined_call_operand.hbm [shape: bf16[3072,512], index: 1, kind: input, shape index: {}]
  %s2 = inlined_call_operand.hbm [shape: f32[1,512], index: 2, kind: input, shape index: {}]
  %s3 = inlined_call_operand.hbm [shape: bf16[512,256], index: 3, kind: input, shape index: {}]
  %s4 = inlined_call_operand.hbm [shape: f32[1,256], index: 4, kind: input, shape index: {}]
  %s5 = inlined_call_operand.hbm [shape: f32[1,256], index: 5, kind: input, shape index: {}]
  %s6 = inlined_call_operand.<no memory space> [shape: f32[1,1], index: 6, kind: input, shape index: {}]
  %s7 = inlined_call_operand.vmem [shape: f32[8,1], index: 7, kind: output, shape index: {}]
  %s8 = sld [smem:[#allocation0]]
  $region93: #{tpu_custom_call.1} parent=0
    _
  %s10 = ssub.s32 1, %s8
  %s11 = scalar_select 0, %s10, %s8
  %v12 = vstv %s6
  %13 = vst [vmem:[#allocation3] sm:$0x1] %v12
  $region1: #{tpu_custom_call.1} parent=0
    #allocation4 [shape = 'u8[24576]{0}', space=vmem, size = 0x6000, scoped, tag = 'input window, operand 0']
    #allocation5 [shape = 's32[2]{0}', space=sflag, size = 0x8, scoped, tag = 'scoped memory for tpu_custom_call.1']
    #allocation6 [shape = 'u8[1572864]{0}', space=vmem, size = 0x180000, scoped, tag = 'input window, operand 1']
    #allocation7 [shape = 's32[2]{0}', space=sflag, size = 0x8, scoped, tag = 'scoped memory for tpu_custom_call.1']
    #allocation8 [shape = 'u8[2048]{0}', space=vmem, size = 0x800, scoped, tag = 'input window, operand 2, single buffered']
    #allocation9 [shape = 'u8[262144]{0}', space=vmem, size = 0x40000, scoped, tag = 'input window, operand 3, single buffered']
    #allocation10 [shape = 's32[1]{0}', space=sflag, size = 0x4, scoped, tag = 'scoped memory for tpu_custom_call.1']
    #allocation11 [shape = 'u8[1024]{0}', space=vmem, size = 0x400, scoped, tag = 'input window, operand 4, single buffered']
    #allocation12 [shape = 'u8[1024]{0}', space=vmem, size = 0x400, scoped, tag = 'input window, operand 5, single buffered']
    #allocation13 [shape = 's32[1]{0}', space=sflag, size = 0x4, scoped, tag = 'scoped memory for tpu_custom_call.1']
    %14 = vsyncpa [#allocation5], 0
    %s15 = scalar_lea.sflag [#allocation5], 1
    %16 = vsyncpa %s15, 0
    %17 = vsyncpa [#allocation7], 0
    %s18 = scalar_lea.sflag [#allocation7], 1
    %19 = vsyncpa %s18, 0
    %20 = vsyncpa [#allocation10], 0
    %21 = vsyncpa [#allocation13], 0
    loop: start=0, step=1, limit=6
    $region2: #{tpu_custom_call.1} parent=1 // loop_pre_header
      _
    $region3: #{tpu_custom_call.1} parent=1 // loop_header
      %s23 = sphi 0, %s27
      %p24 = scmp.ge.s32.totalorder %s23, 6
      %s30 = sphi 0, %s42
      %s31 = sphi 0, %s38
      %s32 = sphi 0, %s30
      %s33 = sphi 0, %s31
      %s34 = sphi 0, %s32
      %s35 = sphi 0, %s33
      %s47 = sphi 0, %s49
      %s50 = sphi 0, %s47
      %s51 = sphi 0, %s50
      %s67 = sphi 0, %s51
      %s73 = sphi 0, %s75
      %s76 = sphi 0, %s73
      %s77 = sphi 0, %s76
      %s93 = sphi 0, %s77
      %s97 = sphi 0, %s97
      %s99 = sphi 0, %s97
      %s100 = sphi 0, %s99
      %s114 = sphi 0, %s100
      %s118 = sphi 0, %s118
      %s120 = sphi 0, %s118
      %s121 = sphi 0, %s120
      %s135 = sphi 0, %s121
      %s139 = sphi 0, %s139
      %s141 = sphi 0, %s139
      %s142 = sphi 0, %s141
      %s156 = sphi 0, %s142
      %s160 = sphi 0, %s160
      %s162 = sphi 0, %s160
      %s163 = sphi 0, %s162
      %s177 = sphi 0, %s163
      %s181 = sphi 0, %s181
      %s183 = sphi 0, %s181
      %s184 = sphi 0, %s183
      %s198 = sphi 0, %s184
      %s204 = sphi 0, %s206
      %s207 = sphi 0, %s204
      %s208 = sphi 0, %s207
      %s224 = sphi 0, %s208
    $region4: #{tpu_custom_call.1} parent=1 // loop_header_branch
      %26 = sbr.rel (%p24) target = $region8
    $region5: #{tpu_custom_call.1} parent=1 // loop_body
      %s28 = ssub.s32 %s23, 1
      %s29 = ssub.s32 %s23, 2
      %s36 = sadd.s32 1, %s31
      %p37 = scmp.ge.s32.totalorder %s36, 4
      %s38 = scalar_select %p37, 0, %s36
      %s39 = sadd.s32 1, %s30
      %s40 = scalar_select %p37, %s39, %s30
      %p41 = scmp.ge.s32.totalorder %s40, 1
      %s42 = scalar_select %p41, 0, %s40
      %s43 = ssub.s32 %s30, %s42
      %s44 = ssub.s32 %s31, %s38
      %s45 = sor.u32 %s43, %s44
      %p46 = scmp.eq.s32.totalorder %s45, 0
      %s48 = sadd.s32 %s47, 1
      %s49 = scalar_select %p46, %s47, %s48
      %p52 = pneg %p46
      %p53 = scmp.eq.s32.totalorder %s23, 3
      %p54 = por %p52, %p53
      %p55 = scmp.ne.s32.totalorder %s47, %s50
      %p56 = scmp.eq.s32.totalorder %s23, 0
      %p57 = por %p55, %p56
      %p58 = scmp.ne.s32.totalorder %s47, %s50
      %p59 = scmp.eq.s32.totalorder %s28, 3
      %p60 = por %p58, %p59
      %p61 = scmp.ne.s32.totalorder %s50, %s51
      %p62 = scmp.eq.s32.totalorder %s28, 0
      %p63 = por %p61, %p62
      %p64 = scmp.ne.s32.totalorder %s50, %s51
      %p65 = scmp.eq.s32.totalorder %s29, 3
      %p66 = por %p64, %p65
      %p68 = scmp.ne.s32.totalorder %s51, %s67
      %p69 = scmp.eq.s32.totalorder %s29, 0
      %p70 = por %p68, %p69
      %s71 = ssub.s32 %s31, %s38
      %p72 = scmp.eq.s32.totalorder %s71, 0
      %s74 = sadd.s32 %s73, 1
      %s75 = scalar_select %p72, %s73, %s74
      %p78 = pneg %p72
      %p79 = scmp.eq.s32.totalorder %s23, 3
      %p80 = por %p78, %p79
      %p81 = scmp.ne.s32.totalorder %s73, %s76
      %p82 = scmp.eq.s32.totalorder %s23, 0
      %p83 = por %p81, %p82
      %p84 = scmp.ne.s32.totalorder %s73, %s76
      %p85 = scmp.eq.s32.totalorder %s28, 3
      %p86 = por %p84, %p85
      %p87 = scmp.ne.s32.totalorder %s76, %s77
      %p88 = scmp.eq.s32.totalorder %s28, 0
      %p89 = por %p87, %p88
      %p90 = scmp.ne.s32.totalorder %s76, %s77
      %p91 = scmp.eq.s32.totalorder %s29, 3
      %p92 = por %p90, %p91
      %p94 = scmp.ne.s32.totalorder %s77, %s93
      %p95 = scmp.eq.s32.totalorder %s29, 0
      %p96 = por %p94, %p95
      %s98 = sadd.s32 %s97, 1
      %p101 = scmp.eq.s32.totalorder %s23, 3
      %p102 = scmp.ne.s32.totalorder %s97, %s99
      %p103 = scmp.eq.s32.totalorder %s23, 0
      %p104 = por %p102, %p103
      %p105 = scmp.ne.s32.totalorder %s97, %s99
      %p106 = scmp.eq.s32.totalorder %s28, 3
      %p107 = por %p105, %p106
      %p108 = scmp.ne.s32.totalorder %s99, %s100
      %p109 = scmp.eq.s32.totalorder %s28, 0
      %p110 = por %p108, %p109
      %p111 = scmp.ne.s32.totalorder %s99, %s100
      %p112 = scmp.eq.s32.totalorder %s29, 3
      %p113 = por %p111, %p112
      %p115 = scmp.ne.s32.totalorder %s100, %s114
      %p116 = scmp.eq.s32.totalorder %s29, 0
      %p117 = por %p115, %p116
      %s119 = sadd.s32 %s118, 1
      %p122 = scmp.eq.s32.totalorder %s23, 3
      %p123 = scmp.ne.s32.totalorder %s118, %s120
      %p124 = scmp.eq.s32.totalorder %s23, 0
      %p125 = por %p123, %p124
      %p126 = scmp.ne.s32.totalorder %s118, %s120
      %p127 = scmp.eq.s32.totalorder %s28, 3
      %p128 = por %p126, %p127
      %p129 = scmp.ne.s32.totalorder %s120, %s121
      %p130 = scmp.eq.s32.totalorder %s28, 0
      %p131 = por %p129, %p130
      %p132 = scmp.ne.s32.totalorder %s120, %s121
      %p133 = scmp.eq.s32.totalorder %s29, 3
      %p134 = por %p132, %p133
      %p136 = scmp.ne.s32.totalorder %s121, %s135
      %p137 = scmp.eq.s32.totalorder %s29, 0
      %p138 = por %p136, %p137
      %s140 = sadd.s32 %s139, 1
      %p143 = scmp.eq.s32.totalorder %s23, 3
      %p144 = scmp.ne.s32.totalorder %s139, %s141
      %p145 = scmp.eq.s32.totalorder %s23, 0
      %p146 = por %p144, %p145
      %p147 = scmp.ne.s32.totalorder %s139, %s141
      %p148 = scmp.eq.s32.totalorder %s28, 3
      %p149 = por %p147, %p148
      %p150 = scmp.ne.s32.totalorder %s141, %s142
      %p151 = scmp.eq.s32.totalorder %s28, 0
      %p152 = por %p150, %p151
      %p153 = scmp.ne.s32.totalorder %s141, %s142
      %p154 = scmp.eq.s32.totalorder %s29, 3
      %p155 = por %p153, %p154
      %p157 = scmp.ne.s32.totalorder %s142, %s156
      %p158 = scmp.eq.s32.totalorder %s29, 0
      %p159 = por %p157, %p158
      %s161 = sadd.s32 %s160, 1
      %p164 = scmp.eq.s32.totalorder %s23, 3
      %p165 = scmp.ne.s32.totalorder %s160, %s162
      %p166 = scmp.eq.s32.totalorder %s23, 0
      %p167 = por %p165, %p166
      %p168 = scmp.ne.s32.totalorder %s160, %s162
      %p169 = scmp.eq.s32.totalorder %s28, 3
      %p170 = por %p168, %p169
      %p171 = scmp.ne.s32.totalorder %s162, %s163
      %p172 = scmp.eq.s32.totalorder %s28, 0
      %p173 = por %p171, %p172
      %p174 = scmp.ne.s32.totalorder %s162, %s163
      %p175 = scmp.eq.s32.totalorder %s29, 3
      %p176 = por %p174, %p175
      %p178 = scmp.ne.s32.totalorder %s163, %s177
      %p179 = scmp.eq.s32.totalorder %s29, 0
      %p180 = por %p178, %p179
      %s182 = sadd.s32 %s181, 1
      %p185 = scmp.eq.s32.totalorder %s23, 3
      %p186 = scmp.ne.s32.totalorder %s181, %s183
      %p187 = scmp.eq.s32.totalorder %s23, 0
      %p188 = por %p186, %p187
      %p189 = scmp.ne.s32.totalorder %s181, %s183
      %p190 = scmp.eq.s32.totalorder %s28, 3
      %p191 = por %p189, %p190
      %p192 = scmp.ne.s32.totalorder %s183, %s184
      %p193 = scmp.eq.s32.totalorder %s28, 0
      %p194 = por %p192, %p193
      %p195 = scmp.ne.s32.totalorder %s183, %s184
      %p196 = scmp.eq.s32.totalorder %s29, 3
      %p197 = por %p195, %p196
      %p199 = scmp.ne.s32.totalorder %s184, %s198
      %p200 = scmp.eq.s32.totalorder %s29, 0
      %p201 = por %p199, %p200
      %s202 = ssub.s32 %s30, %s42
      %p203 = scmp.eq.s32.totalorder %s202, 0
      %s205 = sadd.s32 %s204, 1
      %s206 = scalar_select %p203, %s204, %s205
      %p209 = pneg %p203
      %p210 = scmp.eq.s32.totalorder %s23, 3
      %p211 = por %p209, %p210
      %p212 = scmp.ne.s32.totalorder %s204, %s207
      %p213 = scmp.eq.s32.totalorder %s23, 0
      %p214 = por %p212, %p213
      %p215 = scmp.ne.s32.totalorder %s204, %s207
      %p216 = scmp.eq.s32.totalorder %s28, 3
      %p217 = por %p215, %p216
      %p218 = scmp.ne.s32.totalorder %s207, %s208
      %p219 = scmp.eq.s32.totalorder %s28, 0
      %p220 = por %p218, %p219
      %p221 = scmp.ne.s32.totalorder %s207, %s208
      %p222 = scmp.eq.s32.totalorder %s29, 3
      %p223 = por %p221, %p222
      %p225 = scmp.ne.s32.totalorder %s208, %s224
      %p226 = scmp.eq.s32.totalorder %s29, 0
      %p227 = por %p225, %p226
      %p228 = scmp.le.s32.totalorder 1, %s23
      %p229 = scmp.lt.s32.totalorder %s23, 5
      %p230 = pnand %p228, %p229
      %p231 = pneg %p230
      // Predicated region
      $region9: #{tpu_custom_call.1} parent=5 // pred_check
        _
      $region10: #{tpu_custom_call.1} parent=5 // pred_check_branch
        %233 = sbr.rel (%p230) target = $region12
      $region11: #{tpu_custom_call.1} parent=5 // pred_region
        %s234 = ssub.s32 %s23, 1
        // Predicated region
        $region13: #{tpu_custom_call.1} parent=11 // pred_check
          %p235 = pneg %p110
        $region14: #{tpu_custom_call.1} parent=11 // pred_check_branch
          %237 = sbr.rel (%p235) target = $region16
        $region15: #{tpu_custom_call.1} parent=11 // pred_region
          %s239 = ssub.s32 64, 64
          %240 = vsyncadd [#allocation7], %s239
          %s242 = sshll.u32 [#allocation8], 4
          %s243 = int_to_ptr.vmem [resolvable:$true] %s242
          %245 = dma.hbm_to_vmem [thread:$0]  %s2, 64, %s243, [#allocation7]
        $region16: #{tpu_custom_call.1} parent=11 // pred_fallthru
          _
        // Predicated region
        $region17: #{tpu_custom_call.1} parent=11 // pred_check
          %p246 = pneg %p131
        $region18: #{tpu_custom_call.1} parent=11 // pred_check_branch
          %248 = sbr.rel (%p246) target = $region20
        $region19: #{tpu_custom_call.1} parent=11 // pred_region
          %s250 = ssub.s32 8192, 8192
          %251 = vsyncadd [#allocation10], %s250
          %s252 = sshll.u32 [#allocation9], 4
          %s253 = int_to_ptr.vmem [resolvable:$true] %s252
          %258 = dma.hbm_to_vmem [thread:$0]  %s3, 8192, %s253, [#allocation10], 128, 128, 8
        $region20: #{tpu_custom_call.1} parent=11 // pred_fallthru
          _
        // Predicated region
        $region21: #{tpu_custom_call.1} parent=11 // pred_check
          %p259 = pneg %p152
        $region22: #{tpu_custom_call.1} parent=11 // pred_check_branch
          %261 = sbr.rel (%p259) target = $region24
        $region23: #{tpu_custom_call.1} parent=11 // pred_region
          %s263 = ssub.s32 32, 32
          %264 = vsyncadd [#allocation10], %s263
          %s266 = sshll.u32 [#allocation11], 4
          %s267 = int_to_ptr.vmem [resolvable:$true] %s266
          %269 = dma.hbm_to_vmem [thread:$0]  %s4, 32, %s267, [#allocation10]
        $region24: #{tpu_custom_call.1} parent=11 // pred_fallthru
          _
        // Predicated region
        $region25: #{tpu_custom_call.1} parent=11 // pred_check
          %p270 = pneg %p173
        $region26: #{tpu_custom_call.1} parent=11 // pred_check_branch
          %272 = sbr.rel (%p270) target = $region28
        $region27: #{tpu_custom_call.1} parent=11 // pred_region
          %s274 = ssub.s32 32, 32
          %275 = vsyncadd [#allocation13], %s274
          %s277 = sshll.u32 [#allocation12], 4
          %s278 = int_to_ptr.vmem [resolvable:$true] %s277
          %280 = dma.hbm_to_vmem [thread:$0]  %s5, 32, %s278, [#allocation13]
        $region28: #{tpu_custom_call.1} parent=11 // pred_fallthru
          _
        // Predicated region
        $region29: #{tpu_custom_call.1} parent=11 // pred_check
          %p281 = pneg %p194
        $region30: #{tpu_custom_call.1} parent=11 // pred_check_branch
          %283 = sbr.rel (%p281) target = $region32
        $region31: #{tpu_custom_call.1} parent=11 // pred_region
          _
        $region32: #{tpu_custom_call.1} parent=11 // pred_fallthru
          _
      $region12: #{tpu_custom_call.1} parent=5 // pred_fallthru
        _
      %p284 = scmp.lt.s32.totalorder %s23, 4
      // Predicated region
      $region33: #{tpu_custom_call.1} parent=5 // pred_check
        %p285 = pneg %p284
      $region34: #{tpu_custom_call.1} parent=5 // pred_check_branch
        %287 = sbr.rel (%p285) target = $region36
      $region35: #{tpu_custom_call.1} parent=5 // pred_region
        // Predicated region
        $region37: #{tpu_custom_call.1} parent=35 // pred_check
          %p288 = pneg %p57
        $region38: #{tpu_custom_call.1} parent=35 // pred_check_branch
          %290 = sbr.rel (%p288) target = $region40
        $region39: #{tpu_custom_call.1} parent=35 // pred_region
          %s291 = sand.u32 %s47, 1
          %s292 = scalar_lea.sflag [#allocation5], %s291
          %s293 = sand.u32 %s47, 1
          %s294 = smul.addr %s293, 24
          %s295 = scalar_lea.vmem [#allocation4], %s294
          %s296 = smul.u32 6, %s31
          %s298 = ssub.s32 384, 384
          %299 = vsyncadd %s292, %s298
          %s300 = smul.addr %s30, 24
          %s301 = sadd.s32 %s296, %s300
          %s302 = smul.addr %s301, 64
          %s303 = scalar_lea.hbm %s0, %s302
          %s305 = sshll.u32 %s295, 4
          %s306 = int_to_ptr.vmem [resolvable:$true] %s305
          %308 = dma.hbm_to_vmem [thread:$0]  %s303, 384, %s306, %s292
        $region40: #{tpu_custom_call.1} parent=35 // pred_fallthru
          _
        // Predicated region
        $region41: #{tpu_custom_call.1} parent=35 // pred_check
          %p309 = pneg %p83
        $region42: #{tpu_custom_call.1} parent=35 // pred_check_branch
          %311 = sbr.rel (%p309) target = $region44
        $region43: #{tpu_custom_call.1} parent=35 // pred_region
          %s312 = sand.u32 %s23, 1
          %s313 = scalar_lea.sflag [#allocation7], %s312
          %s314 = sand.u32 %s73, 1
          %s315 = smul.addr %s314, 1536
          %s316 = scalar_lea.vmem [#allocation6], %s315
          %s317 = smul.u32 96, %s31
          %s319 = ssub.s32 24576, 24576
          %320 = vsyncadd %s313, %s319
          %s321 = smul.addr %s317, 4
          %s322 = smul.addr %s321, 64
          %s323 = scalar_lea.hbm %s1, %s322
          %s324 = sshll.u32 %s316, 4
          %s325 = int_to_ptr.vmem [resolvable:$true] %s324
          %330 = dma.hbm_to_vmem [thread:$0]  %s323, 24576, %s325, %s313, 256, 256, 16
        $region44: #{tpu_custom_call.1} parent=35 // pred_fallthru
          _
      $region36: #{tpu_custom_call.1} parent=5 // pred_fallthru
        _
      %p331 = scmp.le.s32.totalorder 1, %s23
      %p332 = scmp.lt.s32.totalorder %s23, 5
      %p333 = pnand %p331, %p332
      %p334 = pneg %p333
      // Predicated region
      $region45: #{tpu_custom_call.1} parent=5 // pred_check
        _
      $region46: #{tpu_custom_call.1} parent=5 // pred_check_branch
        %336 = sbr.rel (%p333) target = $region48
      $region47: #{tpu_custom_call.1} parent=5 // pred_region
        %s337 = ssub.s32 %s23, 1
        %s338 = sand.u32 %s50, 1
        %s339 = scalar_lea.sflag [#allocation5], %s338
        %s340 = sand.u32 %s50, 1
        %s341 = smul.addr %s340, 24
        %s342 = scalar_lea.vmem [#allocation4], %s341
        // Predicated region
        $region49: #{tpu_custom_call.1} parent=47 // pred_check
          %p343 = pneg %p63
        $region50: #{tpu_custom_call.1} parent=47 // pred_check_branch
          %345 = sbr.rel (%p343) target = $region52
        $region51: #{tpu_custom_call.1} parent=47 // pred_region
          %346 = dma.done %s339, 384
        $region52: #{tpu_custom_call.1} parent=47 // pred_fallthru
          _
        %s347 = sand.u32 %s28, 1
        %s348 = scalar_lea.sflag [#allocation7], %s347
        %s349 = sand.u32 %s76, 1
        %s350 = smul.addr %s349, 1536
        %s351 = scalar_lea.vmem [#allocation6], %s350
        // Predicated region
        $region53: #{tpu_custom_call.1} parent=47 // pred_check
          %p352 = pneg %p89
        $region54: #{tpu_custom_call.1} parent=47 // pred_check_branch
          %354 = sbr.rel (%p352) target = $region56
        $region55: #{tpu_custom_call.1} parent=47 // pred_region
          %355 = dma.done %s348, 24576
        $region56: #{tpu_custom_call.1} parent=47 // pred_fallthru
          _
        // Predicated region
        $region57: #{tpu_custom_call.1} parent=47 // pred_check
          %p356 = pneg %p110
        $region58: #{tpu_custom_call.1} parent=47 // pred_check_branch
          %358 = sbr.rel (%p356) target = $region60
        $region59: #{tpu_custom_call.1} parent=47 // pred_region
          %359 = dma.done [#allocation7], 64
        $region60: #{tpu_custom_call.1} parent=47 // pred_fallthru
          _
        // Predicated region
        $region61: #{tpu_custom_call.1} parent=47 // pred_check
          %p360 = pneg %p131
        $region62: #{tpu_custom_call.1} parent=47 // pred_check_branch
          %362 = sbr.rel (%p360) target = $region64
        $region63: #{tpu_custom_call.1} parent=47 // pred_region
          %363 = dma.done [#allocation10], 8192
        $region64: #{tpu_custom_call.1} parent=47 // pred_fallthru
          _
        // Predicated region
        $region65: #{tpu_custom_call.1} parent=47 // pred_check
          %p364 = pneg %p152
        $region66: #{tpu_custom_call.1} parent=47 // pred_check_branch
          %366 = sbr.rel (%p364) target = $region68
        $region67: #{tpu_custom_call.1} parent=47 // pred_region
          %367 = dma.done [#allocation10], 32
        $region68: #{tpu_custom_call.1} parent=47 // pred_fallthru
          _
        // Predicated region
        $region69: #{tpu_custom_call.1} parent=47 // pred_check
          %p368 = pneg %p173
        $region70: #{tpu_custom_call.1} parent=47 // pred_check_branch
          %370 = sbr.rel (%p368) target = $region72
        $region71: #{tpu_custom_call.1} parent=47 // pred_region
          %371 = dma.done [#allocation13], 32
        $region72: #{tpu_custom_call.1} parent=47 // pred_fallthru
          _
        %s372 = sand.u32 %s50, 1
        %s373 = scalar_lea.sflag [#allocation5], %s372
        %s374 = sand.u32 %s50, 1
        %s375 = smul.addr %s374, 24
        %s376 = scalar_lea.vmem [#allocation4], %s375
        %p377 = pneg %p63
        %p378 = pneg %p60
        %s379 = sand.u32 %s28, 1
        %s380 = scalar_lea.sflag [#allocation7], %s379
        %s381 = sand.u32 %s76, 1
        %s382 = smul.addr %s381, 1536
        %s383 = scalar_lea.vmem [#allocation6], %s382
        %p384 = pneg %p89
        %p385 = pneg %p86
        %p386 = pneg %p110
        %p387 = pneg %p107
        %p388 = pneg %p131
        %p389 = pneg %p128
        %p390 = pneg %p152
        %p391 = pneg %p149
        %p392 = pneg %p173
        %p393 = pneg %p170
        %p394 = pneg %p194
        %p395 = pneg %p191
        %p396 = pneg %p220
        %p397 = pneg %p217
        %p398 = scmp.lt.s32.totalorder %s32, 0
        %s399 = scalar_select %p398, %s32, 0
        %s400 = smul.addr %s399, 8
        %s401 = scalar_lea.vmem %s7, %s400
        %s402 = smul.u32 6, %s33
        %s403 = smul.u32 96, %s33
        %p404 = scmp.lt.s32.totalorder %s32, 0
        %s405 = scalar_select %p404, %s32, 0
        %s406 = smul.addr %s405, 8
        %s407 = scalar_lea.vmem %s7, %s406
        %p408 = scmp.eq.s32.totalorder %s33, 0
        // Predicated region
        $region73: #{tpu_custom_call.1} parent=47 // pred_check
          %p409 = pneg %p408
        $region74: #{tpu_custom_call.1} parent=47 // pred_check_branch
          %411 = sbr.rel (%p409) target = $region76
        $region75: #{tpu_custom_call.1} parent=47 // pred_region
          %412 = vst [vmem:[#allocation2] sm:$0xff] 0.0
          %413 = vst [vmem:[#allocation2 + $0x8] sm:$0xff] 0.0
          %414 = vst [vmem:[#allocation2 + $0x10] sm:$0xff] 0.0
          %415 = vst [vmem:[#allocation2 + $0x18] sm:$0xff] 0.0
        $region76: #{tpu_custom_call.1} parent=47 // pred_fallthru
          _
        %v416 = vld [vmem:[#allocation2] sm:$0xff]
        %v417 = vld [vmem:[#allocation2 + $0x8] sm:$0xff]
        %v418 = vld [vmem:[#allocation2 + $0x10] sm:$0xff]
        %v419 = vld [vmem:[#allocation2 + $0x18] sm:$0xff]
        %v420 = vld [vmem:[%s342] sm:$0xff]
        %v421 = vld [vmem:[%s342 + $0x8] sm:$0xff]
        %v422 = vld [vmem:[%s342 + $0x10] sm:$0xff]
        %v423 = vld [vmem:[%s351] sm:$0xff]
        %v424 = vld [vmem:[%s351 + $0x8] sm:$0xff]
        %v425 = vld [vmem:[%s351 + $0x10] sm:$0xff]
        %v426 = vld [vmem:[%s351 + $0x18] sm:$0xff]
        %v427 = vld [vmem:[%s351 + $0x20] sm:$0xff]
        %v428 = vld [vmem:[%s351 + $0x28] sm:$0xff]
        %v429 = vld [vmem:[%s351 + $0x30] sm:$0xff]
        %v430 = vld [vmem:[%s351 + $0x38] sm:$0xff]
        %v431 = vld [vmem:[%s351 + $0x40] sm:$0xff]
        %v432 = vld [vmem:[%s351 + $0x48] sm:$0xff]
        %v433 = vld [vmem:[%s351 + $0x50] sm:$0xff]
        %v434 = vld [vmem:[%s351 + $0x58] sm:$0xff]
        %v435 = vld [vmem:[%s351 + $0x60] sm:$0xff]
        %v436 = vld [vmem:[%s351 + $0x68] sm:$0xff]
        %v437 = vld [vmem:[%s351 + $0x70] sm:$0xff]
        %v438 = vld [vmem:[%s351 + $0x78] sm:$0xff]
        %v439 = vld [vmem:[%s351 + $0x80] sm:$0xff]
        %v440 = vld [vmem:[%s351 + $0x88] sm:$0xff]
        %v441 = vld [vmem:[%s351 + $0x90] sm:$0xff]
        %v442 = vld [vmem:[%s351 + $0x98] sm:$0xff]
        %v443 = vld [vmem:[%s351 + $0xa0] sm:$0xff]
        %v444 = vld [vmem:[%s351 + $0xa8] sm:$0xff]
        %v445 = vld [vmem:[%s351 + $0xb0] sm:$0xff]
        %v446 = vld [vmem:[%s351 + $0xb8] sm:$0xff]
        %v447 = vld [vmem:[%s351 + $0xc0] sm:$0xff]
        %v448 = vld [vmem:[%s351 + $0xc8] sm:$0xff]
        %v449 = vld [vmem:[%s351 + $0xd0] sm:$0xff]
        %v450 = vld [vmem:[%s351 + $0xd8] sm:$0xff]
        %v451 = vld [vmem:[%s351 + $0xe0] sm:$0xff]
        %v452 = vld [vmem:[%s351 + $0xe8] sm:$0xff]
        %v453 = vld [vmem:[%s351 + $0xf0] sm:$0xff]
        %v454 = vld [vmem:[%s351 + $0xf8] sm:$0xff]
        %v455 = vld [vmem:[%s351 + $0x100] sm:$0xff]
        %v456 = vld [vmem:[%s351 + $0x108] sm:$0xff]
        %v457 = vld [vmem:[%s351 + $0x110] sm:$0xff]
        %v458 = vld [vmem:[%s351 + $0x118] sm:$0xff]
        %v459 = vld [vmem:[%s351 + $0x120] sm:$0xff]
        %v460 = vld [vmem:[%s351 + $0x128] sm:$0xff]
        %v461 = vld [vmem:[%s351 + $0x130] sm:$0xff]
        %v462 = vld [vmem:[%s351 + $0x138] sm:$0xff]
        %v463 = vld [vmem:[%s351 + $0x140] sm:$0xff]
        %v464 = vld [vmem:[%s351 + $0x148] sm:$0xff]
        %v465 = vld [vmem:[%s351 + $0x150] sm:$0xff]
        %v466 = vld [vmem:[%s351 + $0x158] sm:$0xff]
        %v467 = vld [vmem:[%s351 + $0x160] sm:$0xff]
        %v468 = vld [vmem:[%s351 + $0x168] sm:$0xff]
        %v469 = vld [vmem:[%s351 + $0x170] sm:$0xff]
        %v470 = vld [vmem:[%s351 + $0x178] sm:$0xff]
        %v471 = vld [vmem:[%s351 + $0x180] sm:$0xff]
        %v472 = vld [vmem:[%s351 + $0x188] sm:$0xff]
        %v473 = vld [vmem:[%s351 + $0x190] sm:$0xff]
        %v474 = vld [vmem:[%s351 + $0x198] sm:$0xff]
        %v475 = vld [vmem:[%s351 + $0x1a0] sm:$0xff]
        %v476 = vld [vmem:[%s351 + $0x1a8] sm:$0xff]
        %v477 = vld [vmem:[%s351 + $0x1b0] sm:$0xff]
        %v478 = vld [vmem:[%s351 + $0x1b8] sm:$0xff]
        %v479 = vld [vmem:[%s351 + $0x1c0] sm:$0xff]
        %v480 = vld [vmem:[%s351 + $0x1c8] sm:$0xff]
        %v481 = vld [vmem:[%s351 + $0x1d0] sm:$0xff]
        %v482 = vld [vmem:[%s351 + $0x1d8] sm:$0xff]
        %v483 = vld [vmem:[%s351 + $0x1e0] sm:$0xff]
        %v484 = vld [vmem:[%s351 + $0x1e8] sm:$0xff]
        %v485 = vld [vmem:[%s351 + $0x1f0] sm:$0xff]
        %v486 = vld [vmem:[%s351 + $0x1f8] sm:$0xff]
        %v487 = vld [vmem:[%s351 + $0x200] sm:$0xff]
        %v488 = vld [vmem:[%s351 + $0x208] sm:$0xff]
        %v489 = vld [vmem:[%s351 + $0x210] sm:$0xff]
        %v490 = vld [vmem:[%s351 + $0x218] sm:$0xff]
        %v491 = vld [vmem:[%s351 + $0x220] sm:$0xff]
        %v492 = vld [vmem:[%s351 + $0x228] sm:$0xff]
        %v493 = vld [vmem:[%s351 + $0x230] sm:$0xff]
        %v494 = vld [vmem:[%s351 + $0x238] sm:$0xff]
        %v495 = vld [vmem:[%s351 + $0x240] sm:$0xff]
        %v496 = vld [vmem:[%s351 + $0x248] sm:$0xff]
        %v497 = vld [vmem:[%s351 + $0x250] sm:$0xff]
        %v498 = vld [vmem:[%s351 + $0x258] sm:$0xff]
        %v499 = vld [vmem:[%s351 + $0x260] sm:$0xff]
        %v500 = vld [vmem:[%s351 + $0x268] sm:$0xff]
        %v501 = vld [vmem:[%s351 + $0x270] sm:$0xff]
        %v502 = vld [vmem:[%s351 + $0x278] sm:$0xff]
        %v503 = vld [vmem:[%s351 + $0x280] sm:$0xff]
        %v504 = vld [vmem:[%s351 + $0x288] sm:$0xff]
        %v505 = vld [vmem:[%s351 + $0x290] sm:$0xff]
        %v506 = vld [vmem:[%s351 + $0x298] sm:$0xff]
        %v507 = vld [vmem:[%s351 + $0x2a0] sm:$0xff]
        %v508 = vld [vmem:[%s351 + $0x2a8] sm:$0xff]
        %v509 = vld [vmem:[%s351 + $0x2b0] sm:$0xff]
        %v510 = vld [vmem:[%s351 + $0x2b8] sm:$0xff]
        %v511 = vld [vmem:[%s351 + $0x2c0] sm:$0xff]
        %v512 = vld [vmem:[%s351 + $0x2c8] sm:$0xff]
        %v513 = vld [vmem:[%s351 + $0x2d0] sm:$0xff]
        %v514 = vld [vmem:[%s351 + $0x2d8] sm:$0xff]
        %v515 = vld [vmem:[%s351 + $0x2e0] sm:$0xff]
        %v516 = vld [vmem:[%s351 + $0x2e8] sm:$0xff]
        %v517 = vld [vmem:[%s351 + $0x2f0] sm:$0xff]
        %v518 = vld [vmem:[%s351 + $0x2f8] sm:$0xff]
        %v519 = vld [vmem:[%s351 + $0x300] sm:$0xff]
        %v520 = vld [vmem:[%s351 + $0x308] sm:$0xff]
        %v521 = vld [vmem:[%s351 + $0x310] sm:$0xff]
        %v522 = vld [vmem:[%s351 + $0x318] sm:$0xff]
        %v523 = vld [vmem:[%s351 + $0x320] sm:$0xff]
        %v524 = vld [vmem:[%s351 + $0x328] sm:$0xff]
        %v525 = vld [vmem:[%s351 + $0x330] sm:$0xff]
        %v526 = vld [vmem:[%s351 + $0x338] sm:$0xff]
        %v527 = vld [vmem:[%s351 + $0x340] sm:$0xff]
        %v528 = vld [vmem:[%s351 + $0x348] sm:$0xff]
        %v529 = vld [vmem:[%s351 + $0x350] sm:$0xff]
        %v530 = vld [vmem:[%s351 + $0x358] sm:$0xff]
        %v531 = vld [vmem:[%s351 + $0x360] sm:$0xff]
        %v532 = vld [vmem:[%s351 + $0x368] sm:$0xff]
        %v533 = vld [vmem:[%s351 + $0x370] sm:$0xff]
        %v534 = vld [vmem:[%s351 + $0x378] sm:$0xff]
        %v535 = vld [vmem:[%s351 + $0x380] sm:$0xff]
        %v536 = vld [vmem:[%s351 + $0x388] sm:$0xff]
        %v537 = vld [vmem:[%s351 + $0x390] sm:$0xff]
        %v538 = vld [vmem:[%s351 + $0x398] sm:$0xff]
        %v539 = vld [vmem:[%s351 + $0x3a0] sm:$0xff]
        %v540 = vld [vmem:[%s351 + $0x3a8] sm:$0xff]
        %v541 = vld [vmem:[%s351 + $0x3b0] sm:$0xff]
        %v542 = vld [vmem:[%s351 + $0x3b8] sm:$0xff]
        %v543 = vld [vmem:[%s351 + $0x3c0] sm:$0xff]
        %v544 = vld [vmem:[%s351 + $0x3c8] sm:$0xff]
        %v545 = vld [vmem:[%s351 + $0x3d0] sm:$0xff]
        %v546 = vld [vmem:[%s351 + $0x3d8] sm:$0xff]
        %v547 = vld [vmem:[%s351 + $0x3e0] sm:$0xff]
        %v548 = vld [vmem:[%s351 + $0x3e8] sm:$0xff]
        %v549 = vld [vmem:[%s351 + $0x3f0] sm:$0xff]
        %v550 = vld [vmem:[%s351 + $0x3f8] sm:$0xff]
        %v551 = vld [vmem:[%s351 + $0x400] sm:$0xff]
        %v552 = vld [vmem:[%s351 + $0x408] sm:$0xff]
        %v553 = vld [vmem:[%s351 + $0x410] sm:$0xff]
        %v554 = vld [vmem:[%s351 + $0x418] sm:$0xff]
        %v555 = vld [vmem:[%s351 + $0x420] sm:$0xff]
        %v556 = vld [vmem:[%s351 + $0x428] sm:$0xff]
        %v557 = vld [vmem:[%s351 + $0x430] sm:$0xff]
        %v558 = vld [vmem:[%s351 + $0x438] sm:$0xff]
        %v559 = vld [vmem:[%s351 + $0x440] sm:$0xff]
        %v560 = vld [vmem:[%s351 + $0x448] sm:$0xff]
        %v561 = vld [vmem:[%s351 + $0x450] sm:$0xff]
        %v562 = vld [vmem:[%s351 + $0x458] sm:$0xff]
        %v563 = vld [vmem:[%s351 + $0x460] sm:$0xff]
        %v564 = vld [vmem:[%s351 + $0x468] sm:$0xff]
        %v565 = vld [vmem:[%s351 + $0x470] sm:$0xff]
        %v566 = vld [vmem:[%s351 + $0x478] sm:$0xff]
        %v567 = vld [vmem:[%s351 + $0x480] sm:$0xff]
        %v568 = vld [vmem:[%s351 + $0x488] sm:$0xff]
        %v569 = vld [vmem:[%s351 + $0x490] sm:$0xff]
        %v570 = vld [vmem:[%s351 + $0x498] sm:$0xff]
        %v571 = vld [vmem:[%s351 + $0x4a0] sm:$0xff]
        %v572 = vld [vmem:[%s351 + $0x4a8] sm:$0xff]
        %v573 = vld [vmem:[%s351 + $0x4b0] sm:$0xff]
        %v574 = vld [vmem:[%s351 + $0x4b8] sm:$0xff]
        %v575 = vld [vmem:[%s351 + $0x4c0] sm:$0xff]
        %v576 = vld [vmem:[%s351 + $0x4c8] sm:$0xff]
        %v577 = vld [vmem:[%s351 + $0x4d0] sm:$0xff]
        %v578 = vld [vmem:[%s351 + $0x4d8] sm:$0xff]
        %v579 = vld [vmem:[%s351 + $0x4e0] sm:$0xff]
        %v580 = vld [vmem:[%s351 + $0x4e8] sm:$0xff]
        %v581 = vld [vmem:[%s351 + $0x4f0] sm:$0xff]
        %v582 = vld [vmem:[%s351 + $0x4f8] sm:$0xff]
        %v583 = vld [vmem:[%s351 + $0x500] sm:$0xff]
        %v584 = vld [vmem:[%s351 + $0x508] sm:$0xff]
        %v585 = vld [vmem:[%s351 + $0x510] sm:$0xff]
        %v586 = vld [vmem:[%s351 + $0x518] sm:$0xff]
        %v587 = vld [vmem:[%s351 + $0x520] sm:$0xff]
        %v588 = vld [vmem:[%s351 + $0x528] sm:$0xff]
        %v589 = vld [vmem:[%s351 + $0x530] sm:$0xff]
        %v590 = vld [vmem:[%s351 + $0x538] sm:$0xff]
        %v591 = vld [vmem:[%s351 + $0x540] sm:$0xff]
        %v592 = vld [vmem:[%s351 + $0x548] sm:$0xff]
        %v593 = vld [vmem:[%s351 + $0x550] sm:$0xff]
        %v594 = vld [vmem:[%s351 + $0x558] sm:$0xff]
        %v595 = vld [vmem:[%s351 + $0x560] sm:$0xff]
        %v596 = vld [vmem:[%s351 + $0x568] sm:$0xff]
        %v597 = vld [vmem:[%s351 + $0x570] sm:$0xff]
        %v598 = vld [vmem:[%s351 + $0x578] sm:$0xff]
        %v599 = vld [vmem:[%s351 + $0x580] sm:$0xff]
        %v600 = vld [vmem:[%s351 + $0x588] sm:$0xff]
        %v601 = vld [vmem:[%s351 + $0x590] sm:$0xff]
        %v602 = vld [vmem:[%s351 + $0x598] sm:$0xff]
        %v603 = vld [vmem:[%s351 + $0x5a0] sm:$0xff]
        %v604 = vld [vmem:[%s351 + $0x5a8] sm:$0xff]
        %v605 = vld [vmem:[%s351 + $0x5b0] sm:$0xff]
        %v606 = vld [vmem:[%s351 + $0x5b8] sm:$0xff]
        %v607 = vld [vmem:[%s351 + $0x5c0] sm:$0xff]
        %v608 = vld [vmem:[%s351 + $0x5c8] sm:$0xff]
        %v609 = vld [vmem:[%s351 + $0x5d0] sm:$0xff]
        %v610 = vld [vmem:[%s351 + $0x5d8] sm:$0xff]
        %v611 = vld [vmem:[%s351 + $0x5e0] sm:$0xff]
        %v612 = vld [vmem:[%s351 + $0x5e8] sm:$0xff]
        %v613 = vld [vmem:[%s351 + $0x5f0] sm:$0xff]
        %v614 = vld [vmem:[%s351 + $0x5f8] sm:$0xff]
        %v618 = vunpack.c.l.b16 %v420
        %v619 = vunpack.c.h.b16 %v420
        %v620 = vunpack.c.l.b16 %v421
        %v621 = vunpack.c.h.b16 %v421
        %v622 = vunpack.c.l.b16 %v422
        %v623 = vunpack.c.h.b16 %v422
        %v624 = vpack.c.b16 %v618, %v618
        %v625 = vpack.c.b16 %v619, %v619
        %v626 = vpack.c.b16 %v620, %v620
        %v627 = vpack.c.b16 %v621, %v621
        %v628 = vpack.c.b16 %v622, %v622
        %v629 = vpack.c.b16 %v623, %v623
        %v828 = vunpack.c.l.b16 %v423
        %v829 = vunpack.c.h.b16 %v423
        %v830 = vunpack.c.l.b16 %v424
        %v831 = vunpack.c.h.b16 %v424
        %v832 = vunpack.c.l.b16 %v425
        %v833 = vunpack.c.h.b16 %v425
        %v834 = vunpack.c.l.b16 %v426
        %v835 = vunpack.c.h.b16 %v426
        %v836 = vunpack.c.l.b16 %v427
        %v837 = vunpack.c.h.b16 %v427
        %v838 = vunpack.c.l.b16 %v428
        %v839 = vunpack.c.h.b16 %v428
        %v840 = vunpack.c.l.b16 %v429
        %v841 = vunpack.c.h.b16 %v429
        %v842 = vunpack.c.l.b16 %v430
        %v843 = vunpack.c.h.b16 %v430
        %v844 = vunpack.c.l.b16 %v431
        %v845 = vunpack.c.h.b16 %v431
        %v846 = vunpack.c.l.b16 %v432
        %v847 = vunpack.c.h.b16 %v432
        %v848 = vunpack.c.l.b16 %v433
        %v849 = vunpack.c.h.b16 %v433
        %v850 = vunpack.c.l.b16 %v434
        %v851 = vunpack.c.h.b16 %v434
        %v852 = vunpack.c.l.b16 %v435
        %v853 = vunpack.c.h.b16 %v435
        %v854 = vunpack.c.l.b16 %v436
        %v855 = vunpack.c.h.b16 %v436
        %v856 = vunpack.c.l.b16 %v437
        %v857 = vunpack.c.h.b16 %v437
        %v858 = vunpack.c.l.b16 %v438
        %v859 = vunpack.c.h.b16 %v438
        %v860 = vunpack.c.l.b16 %v439
        %v861 = vunpack.c.h.b16 %v439
        %v862 = vunpack.c.l.b16 %v440
        %v863 = vunpack.c.h.b16 %v440
        %v864 = vunpack.c.l.b16 %v441
        %v865 = vunpack.c.h.b16 %v441
        %v866 = vunpack.c.l.b16 %v442
        %v867 = vunpack.c.h.b16 %v442
        %v868 = vunpack.c.l.b16 %v443
        %v869 = vunpack.c.h.b16 %v443
        %v870 = vunpack.c.l.b16 %v444
        %v871 = vunpack.c.h.b16 %v444
        %v872 = vunpack.c.l.b16 %v445
        %v873 = vunpack.c.h.b16 %v445
        %v874 = vunpack.c.l.b16 %v446
        %v875 = vunpack.c.h.b16 %v446
        %v876 = vunpack.c.l.b16 %v447
        %v877 = vunpack.c.h.b16 %v447
        %v878 = vunpack.c.l.b16 %v448
        %v879 = vunpack.c.h.b16 %v448
        %v880 = vunpack.c.l.b16 %v449
        %v881 = vunpack.c.h.b16 %v449
        %v882 = vunpack.c.l.b16 %v450
        %v883 = vunpack.c.h.b16 %v450
        %v884 = vunpack.c.l.b16 %v451
        %v885 = vunpack.c.h.b16 %v451
        %v886 = vunpack.c.l.b16 %v452
        %v887 = vunpack.c.h.b16 %v452
        %v888 = vunpack.c.l.b16 %v453
        %v889 = vunpack.c.h.b16 %v453
        %v890 = vunpack.c.l.b16 %v454
        %v891 = vunpack.c.h.b16 %v454
        %v892 = vunpack.c.l.b16 %v455
        %v893 = vunpack.c.h.b16 %v455
        %v894 = vunpack.c.l.b16 %v456
        %v895 = vunpack.c.h.b16 %v456
        %v896 = vunpack.c.l.b16 %v457
        %v897 = vunpack.c.h.b16 %v457
        %v898 = vunpack.c.l.b16 %v458
        %v899 = vunpack.c.h.b16 %v458
        %v900 = vunpack.c.l.b16 %v459
        %v901 = vunpack.c.h.b16 %v459
        %v902 = vunpack.c.l.b16 %v460
        %v903 = vunpack.c.h.b16 %v460
        %v904 = vunpack.c.l.b16 %v461
        %v905 = vunpack.c.h.b16 %v461
        %v906 = vunpack.c.l.b16 %v462
        %v907 = vunpack.c.h.b16 %v462
        %v908 = vunpack.c.l.b16 %v463
        %v909 = vunpack.c.h.b16 %v463
        %v910 = vunpack.c.l.b16 %v464
        %v911 = vunpack.c.h.b16 %v464
        %v912 = vunpack.c.l.b16 %v465
        %v913 = vunpack.c.h.b16 %v465
        %v914 = vunpack.c.l.b16 %v466
        %v915 = vunpack.c.h.b16 %v466
        %v916 = vunpack.c.l.b16 %v467
        %v917 = vunpack.c.h.b16 %v467
        %v918 = vunpack.c.l.b16 %v468
        %v919 = vunpack.c.h.b16 %v468
        %v920 = vunpack.c.l.b16 %v469
        %v921 = vunpack.c.h.b16 %v469
        %v922 = vunpack.c.l.b16 %v470
        %v923 = vunpack.c.h.b16 %v470
        %v924 = vunpack.c.l.b16 %v471
        %v925 = vunpack.c.h.b16 %v471
        %v926 = vunpack.c.l.b16 %v472
        %v927 = vunpack.c.h.b16 %v472
        %v928 = vunpack.c.l.b16 %v473
        %v929 = vunpack.c.h.b16 %v473
        %v930 = vunpack.c.l.b16 %v474
        %v931 = vunpack.c.h.b16 %v474
        %v932 = vunpack.c.l.b16 %v475
        %v933 = vunpack.c.h.b16 %v475
        %v934 = vunpack.c.l.b16 %v476
        %v935 = vunpack.c.h.b16 %v476
        %v936 = vunpack.c.l.b16 %v477
        %v937 = vunpack.c.h.b16 %v477
        %v938 = vunpack.c.l.b16 %v478
        %v939 = vunpack.c.h.b16 %v478
        %v940 = vunpack.c.l.b16 %v479
        %v941 = vunpack.c.h.b16 %v479
        %v942 = vunpack.c.l.b16 %v480
        %v943 = vunpack.c.h.b16 %v480
        %v944 = vunpack.c.l.b16 %v481
        %v945 = vunpack.c.h.b16 %v481
        %v946 = vunpack.c.l.b16 %v482
        %v947 = vunpack.c.h.b16 %v482
        %v948 = vunpack.c.l.b16 %v483
        %v949 = vunpack.c.h.b16 %v483
        %v950 = vunpack.c.l.b16 %v484
        %v951 = vunpack.c.h.b16 %v484
        %v952 = vunpack.c.l.b16 %v485
        %v953 = vunpack.c.h.b16 %v485
        %v954 = vunpack.c.l.b16 %v486
        %v955 = vunpack.c.h.b16 %v486
        %v956 = vunpack.c.l.b16 %v487
        %v957 = vunpack.c.h.b16 %v487
        %v958 = vunpack.c.l.b16 %v488
        %v959 = vunpack.c.h.b16 %v488
        %v960 = vunpack.c.l.b16 %v489
        %v961 = vunpack.c.h.b16 %v489
        %v962 = vunpack.c.l.b16 %v490
        %v963 = vunpack.c.h.b16 %v490
        %v964 = vunpack.c.l.b16 %v491
        %v965 = vunpack.c.h.b16 %v491
        %v966 = vunpack.c.l.b16 %v492
        %v967 = vunpack.c.h.b16 %v492
        %v968 = vunpack.c.l.b16 %v493
        %v969 = vunpack.c.h.b16 %v493
        %v970 = vunpack.c.l.b16 %v494
        %v971 = vunpack.c.h.b16 %v494
        %v972 = vunpack.c.l.b16 %v495
        %v973 = vunpack.c.h.b16 %v495
        %v974 = vunpack.c.l.b16 %v496
        %v975 = vunpack.c.h.b16 %v496
        %v976 = vunpack.c.l.b16 %v497
        %v977 = vunpack.c.h.b16 %v497
        %v978 = vunpack.c.l.b16 %v498
        %v979 = vunpack.c.h.b16 %v498
        %v980 = vunpack.c.l.b16 %v499
        %v981 = vunpack.c.h.b16 %v499
        %v982 = vunpack.c.l.b16 %v500
        %v983 = vunpack.c.h.b16 %v500
        %v984 = vunpack.c.l.b16 %v501
        %v985 = vunpack.c.h.b16 %v501
        %v986 = vunpack.c.l.b16 %v502
        %v987 = vunpack.c.h.b16 %v502
        %v988 = vunpack.c.l.b16 %v503
        %v989 = vunpack.c.h.b16 %v503
        %v990 = vunpack.c.l.b16 %v504
        %v991 = vunpack.c.h.b16 %v504
        %v992 = vunpack.c.l.b16 %v505
        %v993 = vunpack.c.h.b16 %v505
        %v994 = vunpack.c.l.b16 %v506
        %v995 = vunpack.c.h.b16 %v506
        %v996 = vunpack.c.l.b16 %v507
        %v997 = vunpack.c.h.b16 %v507
        %v998 = vunpack.c.l.b16 %v508
        %v999 = vunpack.c.h.b16 %v508
        %v1000 = vunpack.c.l.b16 %v509
        %v1001 = vunpack.c.h.b16 %v509
        %v1002 = vunpack.c.l.b16 %v510
        %v1003 = vunpack.c.h.b16 %v510
        %v1004 = vunpack.c.l.b16 %v511
        %v1005 = vunpack.c.h.b16 %v511
        %v1006 = vunpack.c.l.b16 %v512
        %v1007 = vunpack.c.h.b16 %v512
        %v1008 = vunpack.c.l.b16 %v513
        %v1009 = vunpack.c.h.b16 %v513
        %v1010 = vunpack.c.l.b16 %v514
        %v1011 = vunpack.c.h.b16 %v514
        %v1012 = vunpack.c.l.b16 %v515
        %v1013 = vunpack.c.h.b16 %v515
        %v1014 = vunpack.c.l.b16 %v516
        %v1015 = vunpack.c.h.b16 %v516
        %v1016 = vunpack.c.l.b16 %v517
        %v1017 = vunpack.c.h.b16 %v517
        %v1018 = vunpack.c.l.b16 %v518
        %v1019 = vunpack.c.h.b16 %v518
        %v1020 = vunpack.c.l.b16 %v519
        %v1021 = vunpack.c.h.b16 %v519
        %v1022 = vunpack.c.l.b16 %v520
        %v1023 = vunpack.c.h.b16 %v520
        %v1024 = vunpack.c.l.b16 %v521
        %v1025 = vunpack.c.h.b16 %v521
        %v1026 = vunpack.c.l.b16 %v522
        %v1027 = vunpack.c.h.b16 %v522
        %v1028 = vunpack.c.l.b16 %v523
        %v1029 = vunpack.c.h.b16 %v523
        %v1030 = vunpack.c.l.b16 %v524
        %v1031 = vunpack.c.h.b16 %v524
        %v1032 = vunpack.c.l.b16 %v525
        %v1033 = vunpack.c.h.b16 %v525
        %v1034 = vunpack.c.l.b16 %v526
        %v1035 = vunpack.c.h.b16 %v526
        %v1036 = vunpack.c.l.b16 %v527
        %v1037 = vunpack.c.h.b16 %v527
        %v1038 = vunpack.c.l.b16 %v528
        %v1039 = vunpack.c.h.b16 %v528
        %v1040 = vunpack.c.l.b16 %v529
        %v1041 = vunpack.c.h.b16 %v529
        %v1042 = vunpack.c.l.b16 %v530
        %v1043 = vunpack.c.h.b16 %v530
        %v1044 = vunpack.c.l.b16 %v531
        %v1045 = vunpack.c.h.b16 %v531
        %v1046 = vunpack.c.l.b16 %v532
        %v1047 = vunpack.c.h.b16 %v532
        %v1048 = vunpack.c.l.b16 %v533
        %v1049 = vunpack.c.h.b16 %v533
        %v1050 = vunpack.c.l.b16 %v534
        %v1051 = vunpack.c.h.b16 %v534
        %v1052 = vunpack.c.l.b16 %v535
        %v1053 = vunpack.c.h.b16 %v535
        %v1054 = vunpack.c.l.b16 %v536
        %v1055 = vunpack.c.h.b16 %v536
        %v1056 = vunpack.c.l.b16 %v537
        %v1057 = vunpack.c.h.b16 %v537
        %v1058 = vunpack.c.l.b16 %v538
        %v1059 = vunpack.c.h.b16 %v538
        %v1060 = vunpack.c.l.b16 %v539
        %v1061 = vunpack.c.h.b16 %v539
        %v1062 = vunpack.c.l.b16 %v540
        %v1063 = vunpack.c.h.b16 %v540
        %v1064 = vunpack.c.l.b16 %v541
        %v1065 = vunpack.c.h.b16 %v541
        %v1066 = vunpack.c.l.b16 %v542
        %v1067 = vunpack.c.h.b16 %v542
        %v1068 = vunpack.c.l.b16 %v543
        %v1069 = vunpack.c.h.b16 %v543
        %v1070 = vunpack.c.l.b16 %v544
        %v1071 = vunpack.c.h.b16 %v544
        %v1072 = vunpack.c.l.b16 %v545
        %v1073 = vunpack.c.h.b16 %v545
        %v1074 = vunpack.c.l.b16 %v546
        %v1075 = vunpack.c.h.b16 %v546
        %v1076 = vunpack.c.l.b16 %v547
        %v1077 = vunpack.c.h.b16 %v547
        %v1078 = vunpack.c.l.b16 %v548
        %v1079 = vunpack.c.h.b16 %v548
        %v1080 = vunpack.c.l.b16 %v549
        %v1081 = vunpack.c.h.b16 %v549
        %v1082 = vunpack.c.l.b16 %v550
        %v1083 = vunpack.c.h.b16 %v550
        %v1084 = vunpack.c.l.b16 %v551
        %v1085 = vunpack.c.h.b16 %v551
        %v1086 = vunpack.c.l.b16 %v552
        %v1087 = vunpack.c.h.b16 %v552
        %v1088 = vunpack.c.l.b16 %v553
        %v1089 = vunpack.c.h.b16 %v553
        %v1090 = vunpack.c.l.b16 %v554
        %v1091 = vunpack.c.h.b16 %v554
        %v1092 = vunpack.c.l.b16 %v555
        %v1093 = vunpack.c.h.b16 %v555
        %v1094 = vunpack.c.l.b16 %v556
        %v1095 = vunpack.c.h.b16 %v556
        %v1096 = vunpack.c.l.b16 %v557
        %v1097 = vunpack.c.h.b16 %v557
        %v1098 = vunpack.c.l.b16 %v558
        %v1099 = vunpack.c.h.b16 %v558
        %v1100 = vunpack.c.l.b16 %v559
        %v1101 = vunpack.c.h.b16 %v559
        %v1102 = vunpack.c.l.b16 %v560
        %v1103 = vunpack.c.h.b16 %v560
        %v1104 = vunpack.c.l.b16 %v561
        %v1105 = vunpack.c.h.b16 %v561
        %v1106 = vunpack.c.l.b16 %v562
        %v1107 = vunpack.c.h.b16 %v562
        %v1108 = vunpack.c.l.b16 %v563
        %v1109 = vunpack.c.h.b16 %v563
        %v1110 = vunpack.c.l.b16 %v564
        %v1111 = vunpack.c.h.b16 %v564
        %v1112 = vunpack.c.l.b16 %v565
        %v1113 = vunpack.c.h.b16 %v565
        %v1114 = vunpack.c.l.b16 %v566
        %v1115 = vunpack.c.h.b16 %v566
        %v1116 = vunpack.c.l.b16 %v567
        %v1117 = vunpack.c.h.b16 %v567
        %v1118 = vunpack.c.l.b16 %v568
        %v1119 = vunpack.c.h.b16 %v568
        %v1120 = vunpack.c.l.b16 %v569
        %v1121 = vunpack.c.h.b16 %v569
        %v1122 = vunpack.c.l.b16 %v570
        %v1123 = vunpack.c.h.b16 %v570
        %v1124 = vunpack.c.l.b16 %v571
        %v1125 = vunpack.c.h.b16 %v571
        %v1126 = vunpack.c.l.b16 %v572
        %v1127 = vunpack.c.h.b16 %v572
        %v1128 = vunpack.c.l.b16 %v573
        %v1129 = vunpack.c.h.b16 %v573
        %v1130 = vunpack.c.l.b16 %v574
        %v1131 = vunpack.c.h.b16 %v574
        %v1132 = vunpack.c.l.b16 %v575
        %v1133 = vunpack.c.h.b16 %v575
        %v1134 = vunpack.c.l.b16 %v576
        %v1135 = vunpack.c.h.b16 %v576
        %v1136 = vunpack.c.l.b16 %v577
        %v1137 = vunpack.c.h.b16 %v577
        %v1138 = vunpack.c.l.b16 %v578
        %v1139 = vunpack.c.h.b16 %v578
        %v1140 = vunpack.c.l.b16 %v579
        %v1141 = vunpack.c.h.b16 %v579
        %v1142 = vunpack.c.l.b16 %v580
        %v1143 = vunpack.c.h.b16 %v580
        %v1144 = vunpack.c.l.b16 %v581
        %v1145 = vunpack.c.h.b16 %v581
        %v1146 = vunpack.c.l.b16 %v582
        %v1147 = vunpack.c.h.b16 %v582
        %v1148 = vunpack.c.l.b16 %v583
        %v1149 = vunpack.c.h.b16 %v583
        %v1150 = vunpack.c.l.b16 %v584
        %v1151 = vunpack.c.h.b16 %v584
        %v1152 = vunpack.c.l.b16 %v585
        %v1153 = vunpack.c.h.b16 %v585
        %v1154 = vunpack.c.l.b16 %v586
        %v1155 = vunpack.c.h.b16 %v586
        %v1156 = vunpack.c.l.b16 %v587
        %v1157 = vunpack.c.h.b16 %v587
        %v1158 = vunpack.c.l.b16 %v588
        %v1159 = vunpack.c.h.b16 %v588
        %v1160 = vunpack.c.l.b16 %v589
        %v1161 = vunpack.c.h.b16 %v589
        %v1162 = vunpack.c.l.b16 %v590
        %v1163 = vunpack.c.h.b16 %v590
        %v1164 = vunpack.c.l.b16 %v591
        %v1165 = vunpack.c.h.b16 %v591
        %v1166 = vunpack.c.l.b16 %v592
        %v1167 = vunpack.c.h.b16 %v592
        %v1168 = vunpack.c.l.b16 %v593
        %v1169 = vunpack.c.h.b16 %v593
        %v1170 = vunpack.c.l.b16 %v594
        %v1171 = vunpack.c.h.b16 %v594
        %v1172 = vunpack.c.l.b16 %v595
        %v1173 = vunpack.c.h.b16 %v595
        %v1174 = vunpack.c.l.b16 %v596
        %v1175 = vunpack.c.h.b16 %v596
        %v1176 = vunpack.c.l.b16 %v597
        %v1177 = vunpack.c.h.b16 %v597
        %v1178 = vunpack.c.l.b16 %v598
        %v1179 = vunpack.c.h.b16 %v598
        %v1180 = vunpack.c.l.b16 %v599
        %v1181 = vunpack.c.h.b16 %v599
        %v1182 = vunpack.c.l.b16 %v600
        %v1183 = vunpack.c.h.b16 %v600
        %v1184 = vunpack.c.l.b16 %v601
        %v1185 = vunpack.c.h.b16 %v601
        %v1186 = vunpack.c.l.b16 %v602
        %v1187 = vunpack.c.h.b16 %v602
        %v1188 = vunpack.c.l.b16 %v603
        %v1189 = vunpack.c.h.b16 %v603
        %v1190 = vunpack.c.l.b16 %v604
        %v1191 = vunpack.c.h.b16 %v604
        %v1192 = vunpack.c.l.b16 %v605
        %v1193 = vunpack.c.h.b16 %v605
        %v1194 = vunpack.c.l.b16 %v606
        %v1195 = vunpack.c.h.b16 %v606
        %v1196 = vunpack.c.l.b16 %v607
        %v1197 = vunpack.c.h.b16 %v607
        %v1198 = vunpack.c.l.b16 %v608
        %v1199 = vunpack.c.h.b16 %v608
        %v1200 = vunpack.c.l.b16 %v609
        %v1201 = vunpack.c.h.b16 %v609
        %v1202 = vunpack.c.l.b16 %v610
        %v1203 = vunpack.c.h.b16 %v610
        %v1204 = vunpack.c.l.b16 %v611
        %v1205 = vunpack.c.h.b16 %v611
        %v1206 = vunpack.c.l.b16 %v612
        %v1207 = vunpack.c.h.b16 %v612
        %v1208 = vunpack.c.l.b16 %v613
        %v1209 = vunpack.c.h.b16 %v613
        %v1210 = vunpack.c.l.b16 %v614
        %v1211 = vunpack.c.h.b16 %v614
        %v1212 = vpack.c.b16 %v832, %v828
        %v1213 = vpack.c.b16 %v833, %v829
        %v1214 = vpack.c.b16 %v834, %v830
        %v1215 = vpack.c.b16 %v835, %v831
        %v1216 = vpack.c.b16 %v840, %v836
        %v1217 = vpack.c.b16 %v841, %v837
        %v1218 = vpack.c.b16 %v842, %v838
        %v1219 = vpack.c.b16 %v843, %v839
        %v1220 = vpack.c.b16 %v848, %v844
        %v1221 = vpack.c.b16 %v849, %v845
        %v1222 = vpack.c.b16 %v850, %v846
        %v1223 = vpack.c.b16 %v851, %v847
        %v1224 = vpack.c.b16 %v856, %v852
        %v1225 = vpack.c.b16 %v857, %v853
        %v1226 = vpack.c.b16 %v858, %v854
        %v1227 = vpack.c.b16 %v859, %v855
        %v1228 = vpack.c.b16 %v864, %v860
        %v1229 = vpack.c.b16 %v865, %v861
        %v1230 = vpack.c.b16 %v866, %v862
        %v1231 = vpack.c.b16 %v867, %v863
        %v1232 = vpack.c.b16 %v872, %v868
        %v1233 = vpack.c.b16 %v873, %v869
        %v1234 = vpack.c.b16 %v874, %v870
        %v1235 = vpack.c.b16 %v875, %v871
        %v1236 = vpack.c.b16 %v880, %v876
        %v1237 = vpack.c.b16 %v881, %v877
        %v1238 = vpack.c.b16 %v882, %v878
        %v1239 = vpack.c.b16 %v883, %v879
        %v1240 = vpack.c.b16 %v888, %v884
        %v1241 = vpack.c.b16 %v889, %v885
        %v1242 = vpack.c.b16 %v890, %v886
        %v1243 = vpack.c.b16 %v891, %v887
        %v1244 = vpack.c.b16 %v896, %v892
        %v1245 = vpack.c.b16 %v897, %v893
        %v1246 = vpack.c.b16 %v898, %v894
        %v1247 = vpack.c.b16 %v899, %v895
        %v1248 = vpack.c.b16 %v904, %v900
        %v1249 = vpack.c.b16 %v905, %v901
        %v1250 = vpack.c.b16 %v906, %v902
        %v1251 = vpack.c.b16 %v907, %v903
        %v1252 = vpack.c.b16 %v912, %v908
        %v1253 = vpack.c.b16 %v913, %v909
        %v1254 = vpack.c.b16 %v914, %v910
        %v1255 = vpack.c.b16 %v915, %v911
        %v1256 = vpack.c.b16 %v920, %v916
        %v1257 = vpack.c.b16 %v921, %v917
        %v1258 = vpack.c.b16 %v922, %v918
        %v1259 = vpack.c.b16 %v923, %v919
        %v1260 = vpack.c.b16 %v928, %v924
        %v1261 = vpack.c.b16 %v929, %v925
        %v1262 = vpack.c.b16 %v930, %v926
        %v1263 = vpack.c.b16 %v931, %v927
        %v1264 = vpack.c.b16 %v936, %v932
        %v1265 = vpack.c.b16 %v937, %v933
        %v1266 = vpack.c.b16 %v938, %v934
        %v1267 = vpack.c.b16 %v939, %v935
        %v1268 = vpack.c.b16 %v944, %v940
        %v1269 = vpack.c.b16 %v945, %v941
        %v1270 = vpack.c.b16 %v946, %v942
        %v1271 = vpack.c.b16 %v947, %v943
        %v1272 = vpack.c.b16 %v952, %v948
        %v1273 = vpack.c.b16 %v953, %v949
        %v1274 = vpack.c.b16 %v954, %v950
        %v1275 = vpack.c.b16 %v955, %v951
        %v1276 = vpack.c.b16 %v960, %v956
        %v1277 = vpack.c.b16 %v961, %v957
        %v1278 = vpack.c.b16 %v962, %v958
        %v1279 = vpack.c.b16 %v963, %v959
        %v1280 = vpack.c.b16 %v968, %v964
        %v1281 = vpack.c.b16 %v969, %v965
        %v1282 = vpack.c.b16 %v970, %v966
        %v1283 = vpack.c.b16 %v971, %v967
        %v1284 = vpack.c.b16 %v976, %v972
        %v1285 = vpack.c.b16 %v977, %v973
        %v1286 = vpack.c.b16 %v978, %v974
        %v1287 = vpack.c.b16 %v979, %v975
        %v1288 = vpack.c.b16 %v984, %v980
        %v1289 = vpack.c.b16 %v985, %v981
        %v1290 = vpack.c.b16 %v986, %v982
        %v1291 = vpack.c.b16 %v987, %v983
        %v1292 = vpack.c.b16 %v992, %v988
        %v1293 = vpack.c.b16 %v993, %v989
        %v1294 = vpack.c.b16 %v994, %v990
        %v1295 = vpack.c.b16 %v995, %v991
        %v1296 = vpack.c.b16 %v1000, %v996
        %v1297 = vpack.c.b16 %v1001, %v997
        %v1298 = vpack.c.b16 %v1002, %v998
        %v1299 = vpack.c.b16 %v1003, %v999
        %v1300 = vpack.c.b16 %v1008, %v1004
        %v1301 = vpack.c.b16 %v1009, %v1005
        %v1302 = vpack.c.b16 %v1010, %v1006
        %v1303 = vpack.c.b16 %v1011, %v1007
        %v1304 = vpack.c.b16 %v1016, %v1012
        %v1305 = vpack.c.b16 %v1017, %v1013
        %v1306 = vpack.c.b16 %v1018, %v1014
        %v1307 = vpack.c.b16 %v1019, %v1015
        %v1308 = vpack.c.b16 %v1024, %v1020
        %v1309 = vpack.c.b16 %v1025, %v1021
        %v1310 = vpack.c.b16 %v1026, %v1022
        %v1311 = vpack.c.b16 %v1027, %v1023
        %v1312 = vpack.c.b16 %v1032, %v1028
        %v1313 = vpack.c.b16 %v1033, %v1029
        %v1314 = vpack.c.b16 %v1034, %v1030
        %v1315 = vpack.c.b16 %v1035, %v1031
        %v1316 = vpack.c.b16 %v1040, %v1036
        %v1317 = vpack.c.b16 %v1041, %v1037
        %v1318 = vpack.c.b16 %v1042, %v1038
        %v1319 = vpack.c.b16 %v1043, %v1039
        %v1320 = vpack.c.b16 %v1048, %v1044
        %v1321 = vpack.c.b16 %v1049, %v1045
        %v1322 = vpack.c.b16 %v1050, %v1046
        %v1323 = vpack.c.b16 %v1051, %v1047
        %v1324 = vpack.c.b16 %v1056, %v1052
        %v1325 = vpack.c.b16 %v1057, %v1053
        %v1326 = vpack.c.b16 %v1058, %v1054
        %v1327 = vpack.c.b16 %v1059, %v1055
        %v1328 = vpack.c.b16 %v1064, %v1060
        %v1329 = vpack.c.b16 %v1065, %v1061
        %v1330 = vpack.c.b16 %v1066, %v1062
        %v1331 = vpack.c.b16 %v1067, %v1063
        %v1332 = vpack.c.b16 %v1072, %v1068
        %v1333 = vpack.c.b16 %v1073, %v1069
        %v1334 = vpack.c.b16 %v1074, %v1070
        %v1335 = vpack.c.b16 %v1075, %v1071
        %v1336 = vpack.c.b16 %v1080, %v1076
        %v1337 = vpack.c.b16 %v1081, %v1077
        %v1338 = vpack.c.b16 %v1082, %v1078
        %v1339 = vpack.c.b16 %v1083, %v1079
        %v1340 = vpack.c.b16 %v1088, %v1084
        %v1341 = vpack.c.b16 %v1089, %v1085
        %v1342 = vpack.c.b16 %v1090, %v1086
        %v1343 = vpack.c.b16 %v1091, %v1087
        %v1344 = vpack.c.b16 %v1096, %v1092
        %v1345 = vpack.c.b16 %v1097, %v1093
        %v1346 = vpack.c.b16 %v1098, %v1094
        %v1347 = vpack.c.b16 %v1099, %v1095
        %v1348 = vpack.c.b16 %v1104, %v1100
        %v1349 = vpack.c.b16 %v1105, %v1101
        %v1350 = vpack.c.b16 %v1106, %v1102
        %v1351 = vpack.c.b16 %v1107, %v1103
        %v1352 = vpack.c.b16 %v1112, %v1108
        %v1353 = vpack.c.b16 %v1113, %v1109
        %v1354 = vpack.c.b16 %v1114, %v1110
        %v1355 = vpack.c.b16 %v1115, %v1111
        %v1356 = vpack.c.b16 %v1120, %v1116
        %v1357 = vpack.c.b16 %v1121, %v1117
        %v1358 = vpack.c.b16 %v1122, %v1118
        %v1359 = vpack.c.b16 %v1123, %v1119
        %v1360 = vpack.c.b16 %v1128, %v1124
        %v1361 = vpack.c.b16 %v1129, %v1125
        %v1362 = vpack.c.b16 %v1130, %v1126
        %v1363 = vpack.c.b16 %v1131, %v1127
        %v1364 = vpack.c.b16 %v1136, %v1132
        %v1365 = vpack.c.b16 %v1137, %v1133
        %v1366 = vpack.c.b16 %v1138, %v1134
        %v1367 = vpack.c.b16 %v1139, %v1135
        %v1368 = vpack.c.b16 %v1144, %v1140
        %v1369 = vpack.c.b16 %v1145, %v1141
        %v1370 = vpack.c.b16 %v1146, %v1142
        %v1371 = vpack.c.b16 %v1147, %v1143
        %v1372 = vpack.c.b16 %v1152, %v1148
        %v1373 = vpack.c.b16 %v1153, %v1149
        %v1374 = vpack.c.b16 %v1154, %v1150
        %v1375 = vpack.c.b16 %v1155, %v1151
        %v1376 = vpack.c.b16 %v1160, %v1156
        %v1377 = vpack.c.b16 %v1161, %v1157
        %v1378 = vpack.c.b16 %v1162, %v1158
        %v1379 = vpack.c.b16 %v1163, %v1159
        %v1380 = vpack.c.b16 %v1168, %v1164
        %v1381 = vpack.c.b16 %v1169, %v1165
        %v1382 = vpack.c.b16 %v1170, %v1166
        %v1383 = vpack.c.b16 %v1171, %v1167
        %v1384 = vpack.c.b16 %v1176, %v1172
        %v1385 = vpack.c.b16 %v1177, %v1173
        %v1386 = vpack.c.b16 %v1178, %v1174
        %v1387 = vpack.c.b16 %v1179, %v1175
        %v1388 = vpack.c.b16 %v1184, %v1180
        %v1389 = vpack.c.b16 %v1185, %v1181
        %v1390 = vpack.c.b16 %v1186, %v1182
        %v1391 = vpack.c.b16 %v1187, %v1183
        %v1392 = vpack.c.b16 %v1192, %v1188
        %v1393 = vpack.c.b16 %v1193, %v1189
        %v1394 = vpack.c.b16 %v1194, %v1190
        %v1395 = vpack.c.b16 %v1195, %v1191
        %v1396 = vpack.c.b16 %v1200, %v1196
        %v1397 = vpack.c.b16 %v1201, %v1197
        %v1398 = vpack.c.b16 %v1202, %v1198
        %v1399 = vpack.c.b16 %v1203, %v1199
        %v1400 = vpack.c.b16 %v1208, %v1204
        %v1401 = vpack.c.b16 %v1209, %v1205
        %v1402 = vpack.c.b16 %v1210, %v1206
        %v1403 = vpack.c.b16 %v1211, %v1207
        %1596 = vmatprep.subr.bf16.mxu0 %v1213
        %1597 = vmatpush1.bf16.msra.mxu0 %v1212
        %1598 = vmatprep.subr.bf16.mxu0 %v1217
        %1599 = vmatpush1.bf16.msra.mxu0 %v1216
        %1600 = vmatprep.subr.bf16.mxu0 %v1221
        %1601 = vmatpush1.bf16.msra.mxu0 %v1220
        %1602 = vmatprep.subr.bf16.mxu0 %v1225
        %1603 = vmatpush1.bf16.msra.mxu0 %v1224
        %1604 = vmatprep.subr.bf16.mxu0 %v1229
        %1605 = vmatpush1.bf16.msra.mxu0 %v1228
        %1606 = vmatprep.subr.bf16.mxu0 %v1233
        %1607 = vmatpush1.bf16.msra.mxu0 %v1232
        %1608 = vmatprep.subr.bf16.mxu0 %v1237
        %1609 = vmatpush1.bf16.msra.mxu0 %v1236
        %1610 = vmatprep.subr.bf16.mxu0 %v1241
        %1611 = vmatpush1.bf16.msra.mxu0 %v1240
        %1612 = vmatprep.subr.bf16.mxu0 %v1245
        %1613 = vmatpush1.bf16.msra.mxu0 %v1244
        %1614 = vmatprep.subr.bf16.mxu0 %v1249
        %1615 = vmatpush1.bf16.msra.mxu0 %v1248
        %1616 = vmatprep.subr.bf16.mxu0 %v1253
        %1617 = vmatpush1.bf16.msra.mxu0 %v1252
        %1618 = vmatprep.subr.bf16.mxu0 %v1257
        %1619 = vmatpush1.bf16.msra.mxu0 %v1256
        %1620 = vmatprep.subr.bf16.mxu0 %v1261
        %1621 = vmatpush1.bf16.msra.mxu0 %v1260
        %1622 = vmatprep.subr.bf16.mxu0 %v1265
        %1623 = vmatpush1.bf16.msra.mxu0 %v1264
        %1624 = vmatprep.subr.bf16.mxu0 %v1269
        %1625 = vmatpush1.bf16.msra.mxu0 %v1268
        %1626 = vmatprep.subr.bf16.mxu0 %v1273
        %1627 = vmatpush1.bf16.msra.mxu0 %v1272
        %1628 = vmatprep.mubr.bf16.mxu0 %v625
        %1629 = vmatmul.mubr.bf16.gmra.mrb[0].mxu0 %v624
        %v1630 = vpop.f32.mrb[0].mxu0
        %v1631 = vadd.f32 0.0, %v1630
        %v1632 = vpop.f32.mrb[0].mxu0
        %v1633 = vadd.f32 0.0, %v1632
        %v1634 = vpop.f32.mrb[0].mxu0
        %v1635 = vpop.f32.mrb[0].mxu0
        %1636 = vdwg.mxu0
        %1637 = vmatprep.subr.bf16.mxu0 %v1277
        %1638 = vmatpush1.bf16.msra.mxu0 %v1276
        %1639 = vmatprep.subr.bf16.mxu0 %v1281
        %1640 = vmatpush1.bf16.msra.mxu0 %v1280
        %1641 = vmatprep.subr.bf16.mxu0 %v1285
        %1642 = vmatpush1.bf16.msra.mxu0 %v1284
        %1643 = vmatprep.subr.bf16.mxu0 %v1289
        %1644 = vmatpush1.bf16.msra.mxu0 %v1288
        %1645 = vmatprep.subr.bf16.mxu0 %v1293
        %1646 = vmatpush1.bf16.msra.mxu0 %v1292
        %1647 = vmatprep.subr.bf16.mxu0 %v1297
        %1648 = vmatpush1.bf16.msra.mxu0 %v1296
        %1649 = vmatprep.subr.bf16.mxu0 %v1301
        %1650 = vmatpush1.bf16.msra.mxu0 %v1300
        %1651 = vmatprep.subr.bf16.mxu0 %v1305
        %1652 = vmatpush1.bf16.msra.mxu0 %v1304
        %1653 = vmatprep.subr.bf16.mxu0 %v1309
        %1654 = vmatpush1.bf16.msra.mxu0 %v1308
        %1655 = vmatprep.subr.bf16.mxu0 %v1313
        %1656 = vmatpush1.bf16.msra.mxu0 %v1312
        %1657 = vmatprep.subr.bf16.mxu0 %v1317
        %1658 = vmatpush1.bf16.msra.mxu0 %v1316
        %1659 = vmatprep.subr.bf16.mxu0 %v1321
        %1660 = vmatpush1.bf16.msra.mxu0 %v1320
        %1661 = vmatprep.subr.bf16.mxu0 %v1325
        %1662 = vmatpush1.bf16.msra.mxu0 %v1324
        %1663 = vmatprep.subr.bf16.mxu0 %v1329
        %1664 = vmatpush1.bf16.msra.mxu0 %v1328
        %1665 = vmatprep.subr.bf16.mxu0 %v1333
        %1666 = vmatpush1.bf16.msra.mxu0 %v1332
        %1667 = vmatprep.subr.bf16.mxu0 %v1337
        %1668 = vmatpush1.bf16.msra.mxu0 %v1336
        %1669 = vmatprep.mubr.bf16.mxu0 %v627
        %1670 = vmatmul.mubr.bf16.gmra.mrb[0].mxu0 %v626
        %v1671 = vpop.f32.mrb[0].mxu0
        %v1672 = vadd.f32 %v1631, %v1671
        %v1673 = vpop.f32.mrb[0].mxu0
        %v1674 = vadd.f32 %v1633, %v1673
        %v1675 = vpop.f32.mrb[0].mxu0
        %v1676 = vpop.f32.mrb[0].mxu0
        %1677 = vdwg.mxu0
        %1678 = vmatprep.subr.bf16.mxu0 %v1341
        %1679 = vmatpush1.bf16.msra.mxu0 %v1340
        %1680 = vmatprep.subr.bf16.mxu0 %v1345
        %1681 = vmatpush1.bf16.msra.mxu0 %v1344
        %1682 = vmatprep.subr.bf16.mxu0 %v1349
        %1683 = vmatpush1.bf16.msra.mxu0 %v1348
        %1684 = vmatprep.subr.bf16.mxu0 %v1353
        %1685 = vmatpush1.bf16.msra.mxu0 %v1352
        %1686 = vmatprep.subr.bf16.mxu0 %v1357
        %1687 = vmatpush1.bf16.msra.mxu0 %v1356
        %1688 = vmatprep.subr.bf16.mxu0 %v1361
        %1689 = vmatpush1.bf16.msra.mxu0 %v1360
        %1690 = vmatprep.subr.bf16.mxu0 %v1365
        %1691 = vmatpush1.bf16.msra.mxu0 %v1364
        %1692 = vmatprep.subr.bf16.mxu0 %v1369
        %1693 = vmatpush1.bf16.msra.mxu0 %v1368
        %1694 = vmatprep.subr.bf16.mxu0 %v1373
        %1695 = vmatpush1.bf16.msra.mxu0 %v1372
        %1696 = vmatprep.subr.bf16.mxu0 %v1377
        %1697 = vmatpush1.bf16.msra.mxu0 %v1376
        %1698 = vmatprep.subr.bf16.mxu0 %v1381
        %1699 = vmatpush1.bf16.msra.mxu0 %v1380
        %1700 = vmatprep.subr.bf16.mxu0 %v1385
        %1701 = vmatpush1.bf16.msra.mxu0 %v1384
        %1702 = vmatprep.subr.bf16.mxu0 %v1389
        %1703 = vmatpush1.bf16.msra.mxu0 %v1388
        %1704 = vmatprep.subr.bf16.mxu0 %v1393
        %1705 = vmatpush1.bf16.msra.mxu0 %v1392
        %1706 = vmatprep.subr.bf16.mxu0 %v1397
        %1707 = vmatpush1.bf16.msra.mxu0 %v1396
        %1708 = vmatprep.subr.bf16.mxu0 %v1401
        %1709 = vmatpush1.bf16.msra.mxu0 %v1400
        %1710 = vmatprep.mubr.bf16.mxu0 %v629
        %1711 = vmatmul.mubr.bf16.gmra.mrb[0].mxu0 %v628
        %v1712 = vpop.f32.mrb[0].mxu0
        %v1713 = vadd.f32 %v1672, %v1712
        %v1714 = vpop.f32.mrb[0].mxu0
        %v1715 = vadd.f32 %v1674, %v1714
        %v1716 = vpop.f32.mrb[0].mxu0
        %v1717 = vpop.f32.mrb[0].mxu0
        %1718 = vdwg.mxu0
        %1719 = vmatprep.subr.bf16.mxu0 %v1215
        %1720 = vmatpush1.bf16.msra.mxu0 %v1214
        %1721 = vmatprep.subr.bf16.mxu0 %v1219
        %1722 = vmatpush1.bf16.msra.mxu0 %v1218
        %1723 = vmatprep.subr.bf16.mxu0 %v1223
        %1724 = vmatpush1.bf16.msra.mxu0 %v1222
        %1725 = vmatprep.subr.bf16.mxu0 %v1227
        %1726 = vmatpush1.bf16.msra.mxu0 %v1226
        %1727 = vmatprep.subr.bf16.mxu0 %v1231
        %1728 = vmatpush1.bf16.msra.mxu0 %v1230
        %1729 = vmatprep.subr.bf16.mxu0 %v1235
        %1730 = vmatpush1.bf16.msra.mxu0 %v1234
        %1731 = vmatprep.subr.bf16.mxu0 %v1239
        %1732 = vmatpush1.bf16.msra.mxu0 %v1238
        %1733 = vmatprep.subr.bf16.mxu0 %v1243
        %1734 = vmatpush1.bf16.msra.mxu0 %v1242
        %1735 = vmatprep.subr.bf16.mxu0 %v1247
        %1736 = vmatpush1.bf16.msra.mxu0 %v1246
        %1737 = vmatprep.subr.bf16.mxu0 %v1251
        %1738 = vmatpush1.bf16.msra.mxu0 %v1250
        %1739 = vmatprep.subr.bf16.mxu0 %v1255
        %1740 = vmatpush1.bf16.msra.mxu0 %v1254
        %1741 = vmatprep.subr.bf16.mxu0 %v1259
        %1742 = vmatpush1.bf16.msra.mxu0 %v1258
        %1743 = vmatprep.subr.bf16.mxu0 %v1263
        %1744 = vmatpush1.bf16.msra.mxu0 %v1262
        %1745 = vmatprep.subr.bf16.mxu0 %v1267
        %1746 = vmatpush1.bf16.msra.mxu0 %v1266
        %1747 = vmatprep.subr.bf16.mxu0 %v1271
        %1748 = vmatpush1.bf16.msra.mxu0 %v1270
        %1749 = vmatprep.subr.bf16.mxu0 %v1275
        %1750 = vmatpush1.bf16.msra.mxu0 %v1274
        %1751 = vmatprep.mubr.bf16.mxu0 %v625
        %1752 = vmatmul.mubr.bf16.gmra.mrb[0].mxu0 %v624
        %v1753 = vpop.f32.mrb[0].mxu0
        %v1754 = vadd.f32 0.0, %v1753
        %v1755 = vpop.f32.mrb[0].mxu0
        %v1756 = vadd.f32 0.0, %v1755
        %v1757 = vpop.f32.mrb[0].mxu0
        %v1758 = vpop.f32.mrb[0].mxu0
        %1759 = vdwg.mxu0
        %1760 = vmatprep.subr.bf16.mxu0 %v1279
        %1761 = vmatpush1.bf16.msra.mxu0 %v1278
        %1762 = vmatprep.subr.bf16.mxu0 %v1283
        %1763 = vmatpush1.bf16.msra.mxu0 %v1282
        %1764 = vmatprep.subr.bf16.mxu0 %v1287
        %1765 = vmatpush1.bf16.msra.mxu0 %v1286
        %1766 = vmatprep.subr.bf16.mxu0 %v1291
        %1767 = vmatpush1.bf16.msra.mxu0 %v1290
        %1768 = vmatprep.subr.bf16.mxu0 %v1295
        %1769 = vmatpush1.bf16.msra.mxu0 %v1294
        %1770 = vmatprep.subr.bf16.mxu0 %v1299
        %1771 = vmatpush1.bf16.msra.mxu0 %v1298
        %1772 = vmatprep.subr.bf16.mxu0 %v1303
        %1773 = vmatpush1.bf16.msra.mxu0 %v1302
        %1774 = vmatprep.subr.bf16.mxu0 %v1307
        %1775 = vmatpush1.bf16.msra.mxu0 %v1306
        %1776 = vmatprep.subr.bf16.mxu0 %v1311
        %1777 = vmatpush1.bf16.msra.mxu0 %v1310
        %1778 = vmatprep.subr.bf16.mxu0 %v1315
        %1779 = vmatpush1.bf16.msra.mxu0 %v1314
        %1780 = vmatprep.subr.bf16.mxu0 %v1319
        %1781 = vmatpush1.bf16.msra.mxu0 %v1318
        %1782 = vmatprep.subr.bf16.mxu0 %v1323
        %1783 = vmatpush1.bf16.msra.mxu0 %v1322
        %1784 = vmatprep.subr.bf16.mxu0 %v1327
        %1785 = vmatpush1.bf16.msra.mxu0 %v1326
        %1786 = vmatprep.subr.bf16.mxu0 %v1331
        %1787 = vmatpush1.bf16.msra.mxu0 %v1330
        %1788 = vmatprep.subr.bf16.mxu0 %v1335
        %1789 = vmatpush1.bf16.msra.mxu0 %v1334
        %1790 = vmatprep.subr.bf16.mxu0 %v1339
        %1791 = vmatpush1.bf16.msra.mxu0 %v1338
        %1792 = vmatprep.mubr.bf16.mxu0 %v627
        %1793 = vmatmul.mubr.bf16.gmra.mrb[0].mxu0 %v626
        %v1794 = vpop.f32.mrb[0].mxu0
        %v1795 = vadd.f32 %v1754, %v1794
        %v1796 = vpop.f32.mrb[0].mxu0
        %v1797 = vadd.f32 %v1756, %v1796
        %v1798 = vpop.f32.mrb[0].mxu0
        %v1799 = vpop.f32.mrb[0].mxu0
        %1800 = vdwg.mxu0
        %1801 = vmatprep.subr.bf16.mxu0 %v1343
        %1802 = vmatpush1.bf16.msra.mxu0 %v1342
        %1803 = vmatprep.subr.bf16.mxu0 %v1347
        %1804 = vmatpush1.bf16.msra.mxu0 %v1346
        %1805 = vmatprep.subr.bf16.mxu0 %v1351
        %1806 = vmatpush1.bf16.msra.mxu0 %v1350
        %1807 = vmatprep.subr.bf16.mxu0 %v1355
        %1808 = vmatpush1.bf16.msra.mxu0 %v1354
        %1809 = vmatprep.subr.bf16.mxu0 %v1359
        %1810 = vmatpush1.bf16.msra.mxu0 %v1358
        %1811 = vmatprep.subr.bf16.mxu0 %v1363
        %1812 = vmatpush1.bf16.msra.mxu0 %v1362
        %1813 = vmatprep.subr.bf16.mxu0 %v1367
        %1814 = vmatpush1.bf16.msra.mxu0 %v1366
        %1815 = vmatprep.subr.bf16.mxu0 %v1371
        %1816 = vmatpush1.bf16.msra.mxu0 %v1370
        %1817 = vmatprep.subr.bf16.mxu0 %v1375
        %1818 = vmatpush1.bf16.msra.mxu0 %v1374
        %1819 = vmatprep.subr.bf16.mxu0 %v1379
        %1820 = vmatpush1.bf16.msra.mxu0 %v1378
        %1821 = vmatprep.subr.bf16.mxu0 %v1383
        %1822 = vmatpush1.bf16.msra.mxu0 %v1382
        %1823 = vmatprep.subr.bf16.mxu0 %v1387
        %1824 = vmatpush1.bf16.msra.mxu0 %v1386
        %1825 = vmatprep.subr.bf16.mxu0 %v1391
        %1826 = vmatpush1.bf16.msra.mxu0 %v1390
        %1827 = vmatprep.subr.bf16.mxu0 %v1395
        %1828 = vmatpush1.bf16.msra.mxu0 %v1394
        %1829 = vmatprep.subr.bf16.mxu0 %v1399
        %1830 = vmatpush1.bf16.msra.mxu0 %v1398
        %1831 = vmatprep.subr.bf16.mxu0 %v1403
        %1832 = vmatpush1.bf16.msra.mxu0 %v1402
        %1833 = vmatprep.mubr.bf16.mxu0 %v629
        %1834 = vmatmul.mubr.bf16.gmra.mrb[0].mxu0 %v628
        %v1835 = vpop.f32.mrb[0].mxu0
        %v1836 = vadd.f32 %v1795, %v1835
        %v1837 = vpop.f32.mrb[0].mxu0
        %v1838 = vadd.f32 %v1797, %v1837
        %v1839 = vpop.f32.mrb[0].mxu0
        %v1840 = vpop.f32.mrb[0].mxu0
        %1841 = vdwg.mxu0
        %v1842 = vadd.f32 %v416, %v1713
        %v1843 = vadd.f32 %v417, %v1715
        %v1844 = vadd.f32 %v418, %v1836
        %v1845 = vadd.f32 %v419, %v1838
        %1846 = vst [vmem:[#allocation2] sm:$0xff] %v1842
        %1847 = vst [vmem:[#allocation2 + $0x8] sm:$0xff] %v1843
        %1848 = vst [vmem:[#allocation2 + $0x10] sm:$0xff] %v1844
        %1849 = vst [vmem:[#allocation2 + $0x18] sm:$0xff] %v1845
        %p1850 = scmp.eq.s32.totalorder %s33, 3
        // Predicated region
        $region77: #{tpu_custom_call.1} parent=47 // pred_check
          %p1851 = pneg %p1850
        $region78: #{tpu_custom_call.1} parent=47 // pred_check_branch
          %1853 = sbr.rel (%p1851) target = $region80
        $region79: #{tpu_custom_call.1} parent=47 // pred_region
          %v1854 = vld [vmem:[#allocation2] sm:$0xff]
          %v1855 = vld [vmem:[#allocation2 + $0x8] sm:$0xff]
          %v1856 = vld [vmem:[#allocation2 + $0x10] sm:$0xff]
          %v1857 = vld [vmem:[#allocation2 + $0x18] sm:$0xff]
          %v1858 = vld [vmem:[#allocation8] sm:$0xf]
          %v1860 = vlaneseq
          %v1861 = vshrl.u32 %v1860, 7
          %v1862 = vsub.s32 0, %v1861
          %v1863 = vrot.slane %v1858, %v1862
          %v1864 = vlaneseq
          %v1865 = vshrl.u32 %v1864, 7
          %v1866 = vsub.s32 1, %v1865
          %v1867 = vrot.slane %v1858, %v1866
          %v1868 = vlaneseq
          %v1869 = vshrl.u32 %v1868, 7
          %v1870 = vsub.s32 2, %v1869
          %v1871 = vrot.slane %v1858, %v1870
          %v1872 = vlaneseq
          %v1873 = vshrl.u32 %v1872, 7
          %v1874 = vsub.s32 3, %v1873
          %v1875 = vrot.slane %v1858, %v1874
          %v1880 = vadd.f32 %v1854, %v1863
          %v1881 = vadd.f32 %v1855, %v1867
          %v1882 = vadd.f32 %v1856, %v1871
          %v1883 = vadd.f32 %v1857, %v1875
          %vm1884 = vcmp.gt.f32.partialorder %v1880, 0.0
          %vm1885 = vcmp.gt.f32.partialorder %v1881, 0.0
          %vm1886 = vcmp.gt.f32.partialorder %v1882, 0.0
          %vm1887 = vcmp.gt.f32.partialorder %v1883, 0.0
          %v1888 = vmul.f32 %v1880, 0.2
          %v1889 = vmul.f32 %v1881, 0.2
          %v1890 = vmul.f32 %v1882, 0.2
          %v1891 = vmul.f32 %v1883, 0.2
          %v1892 = vsel %vm1884, %v1880, %v1888
          %v1893 = vsel %vm1885, %v1881, %v1889
          %v1894 = vsel %vm1886, %v1882, %v1890
          %v1895 = vsel %vm1887, %v1883, %v1891
          %v1896 = vpack.c.bf16 %v1892, %v1892
          %v1897 = vpack.c.bf16 %v1893, %v1893
          %v1898 = vpack.c.bf16 %v1894, %v1894
          %v1899 = vpack.c.bf16 %v1895, %v1895
          %v1900 = vld [vmem:[#allocation9] sm:$0xff]
          %v1901 = vld [vmem:[#allocation9 + $0x8] sm:$0xff]
          %v1902 = vld [vmem:[#allocation9 + $0x10] sm:$0xff]
          %v1903 = vld [vmem:[#allocation9 + $0x18] sm:$0xff]
          %v1904 = vld [vmem:[#allocation9 + $0x20] sm:$0xff]
          %v1905 = vld [vmem:[#allocation9 + $0x28] sm:$0xff]
          %v1906 = vld [vmem:[#allocation9 + $0x30] sm:$0xff]
          %v1907 = vld [vmem:[#allocation9 + $0x38] sm:$0xff]
          %v1908 = vld [vmem:[#allocation9 + $0x40] sm:$0xff]
          %v1909 = vld [vmem:[#allocation9 + $0x48] sm:$0xff]
          %v1910 = vld [vmem:[#allocation9 + $0x50] sm:$0xff]
          %v1911 = vld [vmem:[#allocation9 + $0x58] sm:$0xff]
          %v1912 = vld [vmem:[#allocation9 + $0x60] sm:$0xff]
          %v1913 = vld [vmem:[#allocation9 + $0x68] sm:$0xff]
          %v1914 = vld [vmem:[#allocation9 + $0x70] sm:$0xff]
          %v1915 = vld [vmem:[#allocation9 + $0x78] sm:$0xff]
          %v1916 = vld [vmem:[#allocation9 + $0x80] sm:$0xff]
          %v1917 = vld [vmem:[#allocation9 + $0x88] sm:$0xff]
          %v1918 = vld [vmem:[#allocation9 + $0x90] sm:$0xff]
          %v1919 = vld [vmem:[#allocation9 + $0x98] sm:$0xff]
          %v1920 = vld [vmem:[#allocation9 + $0xa0] sm:$0xff]
          %v1921 = vld [vmem:[#allocation9 + $0xa8] sm:$0xff]
          %v1922 = vld [vmem:[#allocation9 + $0xb0] sm:$0xff]
          %v1923 = vld [vmem:[#allocation9 + $0xb8] sm:$0xff]
          %v1924 = vld [vmem:[#allocation9 + $0xc0] sm:$0xff]
          %v1925 = vld [vmem:[#allocation9 + $0xc8] sm:$0xff]
          %v1926 = vld [vmem:[#allocation9 + $0xd0] sm:$0xff]
          %v1927 = vld [vmem:[#allocation9 + $0xd8] sm:$0xff]
          %v1928 = vld [vmem:[#allocation9 + $0xe0] sm:$0xff]
          %v1929 = vld [vmem:[#allocation9 + $0xe8] sm:$0xff]
          %v1930 = vld [vmem:[#allocation9 + $0xf0] sm:$0xff]
          %v1931 = vld [vmem:[#allocation9 + $0xf8] sm:$0xff]
          %v1932 = vld [vmem:[#allocation9 + $0x100] sm:$0xff]
          %v1933 = vld [vmem:[#allocation9 + $0x108] sm:$0xff]
          %v1934 = vld [vmem:[#allocation9 + $0x110] sm:$0xff]
          %v1935 = vld [vmem:[#allocation9 + $0x118] sm:$0xff]
          %v1936 = vld [vmem:[#allocation9 + $0x120] sm:$0xff]
          %v1937 = vld [vmem:[#allocation9 + $0x128] sm:$0xff]
          %v1938 = vld [vmem:[#allocation9 + $0x130] sm:$0xff]
          %v1939 = vld [vmem:[#allocation9 + $0x138] sm:$0xff]
          %v1940 = vld [vmem:[#allocation9 + $0x140] sm:$0xff]
          %v1941 = vld [vmem:[#allocation9 + $0x148] sm:$0xff]
          %v1942 = vld [vmem:[#allocation9 + $0x150] sm:$0xff]
          %v1943 = vld [vmem:[#allocation9 + $0x158] sm:$0xff]
          %v1944 = vld [vmem:[#allocation9 + $0x160] sm:$0xff]
          %v1945 = vld [vmem:[#allocation9 + $0x168] sm:$0xff]
          %v1946 = vld [vmem:[#allocation9 + $0x170] sm:$0xff]
          %v1947 = vld [vmem:[#allocation9 + $0x178] sm:$0xff]
          %v1948 = vld [vmem:[#allocation9 + $0x180] sm:$0xff]
          %v1949 = vld [vmem:[#allocation9 + $0x188] sm:$0xff]
          %v1950 = vld [vmem:[#allocation9 + $0x190] sm:$0xff]
          %v1951 = vld [vmem:[#allocation9 + $0x198] sm:$0xff]
          %v1952 = vld [vmem:[#allocation9 + $0x1a0] sm:$0xff]
          %v1953 = vld [vmem:[#allocation9 + $0x1a8] sm:$0xff]
          %v1954 = vld [vmem:[#allocation9 + $0x1b0] sm:$0xff]
          %v1955 = vld [vmem:[#allocation9 + $0x1b8] sm:$0xff]
          %v1956 = vld [vmem:[#allocation9 + $0x1c0] sm:$0xff]
          %v1957 = vld [vmem:[#allocation9 + $0x1c8] sm:$0xff]
          %v1958 = vld [vmem:[#allocation9 + $0x1d0] sm:$0xff]
          %v1959 = vld [vmem:[#allocation9 + $0x1d8] sm:$0xff]
          %v1960 = vld [vmem:[#allocation9 + $0x1e0] sm:$0xff]
          %v1961 = vld [vmem:[#allocation9 + $0x1e8] sm:$0xff]
          %v1962 = vld [vmem:[#allocation9 + $0x1f0] sm:$0xff]
          %v1963 = vld [vmem:[#allocation9 + $0x1f8] sm:$0xff]
          %v1964 = vld [vmem:[#allocation11] sm:$0x3]
          %v1966 = vlaneseq
          %v1967 = vshrl.u32 %v1966, 7
          %v1968 = vsub.s32 0, %v1967
          %v1969 = vrot.slane %v1964, %v1968
          %v1970 = vlaneseq
          %v1971 = vshrl.u32 %v1970, 7
          %v1972 = vsub.s32 1, %v1971
          %v1973 = vrot.slane %v1964, %v1972
          %v2040 = vunpack.c.l.b16 %v1900
          %v2041 = vunpack.c.h.b16 %v1900
          %v2042 = vunpack.c.l.b16 %v1901
          %v2043 = vunpack.c.h.b16 %v1901
          %v2044 = vunpack.c.l.b16 %v1902
          %v2045 = vunpack.c.h.b16 %v1902
          %v2046 = vunpack.c.l.b16 %v1903
          %v2047 = vunpack.c.h.b16 %v1903
          %v2048 = vunpack.c.l.b16 %v1904
          %v2049 = vunpack.c.h.b16 %v1904
          %v2050 = vunpack.c.l.b16 %v1905
          %v2051 = vunpack.c.h.b16 %v1905
          %v2052 = vunpack.c.l.b16 %v1906
          %v2053 = vunpack.c.h.b16 %v1906
          %v2054 = vunpack.c.l.b16 %v1907
          %v2055 = vunpack.c.h.b16 %v1907
          %v2056 = vunpack.c.l.b16 %v1908
          %v2057 = vunpack.c.h.b16 %v1908
          %v2058 = vunpack.c.l.b16 %v1909
          %v2059 = vunpack.c.h.b16 %v1909
          %v2060 = vunpack.c.l.b16 %v1910
          %v2061 = vunpack.c.h.b16 %v1910
          %v2062 = vunpack.c.l.b16 %v1911
          %v2063 = vunpack.c.h.b16 %v1911
          %v2064 = vunpack.c.l.b16 %v1912
          %v2065 = vunpack.c.h.b16 %v1912
          %v2066 = vunpack.c.l.b16 %v1913
          %v2067 = vunpack.c.h.b16 %v1913
          %v2068 = vunpack.c.l.b16 %v1914
          %v2069 = vunpack.c.h.b16 %v1914
          %v2070 = vunpack.c.l.b16 %v1915
          %v2071 = vunpack.c.h.b16 %v1915
          %v2072 = vunpack.c.l.b16 %v1916
          %v2073 = vunpack.c.h.b16 %v1916
          %v2074 = vunpack.c.l.b16 %v1917
          %v2075 = vunpack.c.h.b16 %v1917
          %v2076 = vunpack.c.l.b16 %v1918
          %v2077 = vunpack.c.h.b16 %v1918
          %v2078 = vunpack.c.l.b16 %v1919
          %v2079 = vunpack.c.h.b16 %v1919
          %v2080 = vunpack.c.l.b16 %v1920
          %v2081 = vunpack.c.h.b16 %v1920
          %v2082 = vunpack.c.l.b16 %v1921
          %v2083 = vunpack.c.h.b16 %v1921
          %v2084 = vunpack.c.l.b16 %v1922
          %v2085 = vunpack.c.h.b16 %v1922
          %v2086 = vunpack.c.l.b16 %v1923
          %v2087 = vunpack.c.h.b16 %v1923
          %v2088 = vunpack.c.l.b16 %v1924
          %v2089 = vunpack.c.h.b16 %v1924
          %v2090 = vunpack.c.l.b16 %v1925
          %v2091 = vunpack.c.h.b16 %v1925
          %v2092 = vunpack.c.l.b16 %v1926
          %v2093 = vunpack.c.h.b16 %v1926
          %v2094 = vunpack.c.l.b16 %v1927
          %v2095 = vunpack.c.h.b16 %v1927
          %v2096 = vunpack.c.l.b16 %v1928
          %v2097 = vunpack.c.h.b16 %v1928
          %v2098 = vunpack.c.l.b16 %v1929
          %v2099 = vunpack.c.h.b16 %v1929
          %v2100 = vunpack.c.l.b16 %v1930
          %v2101 = vunpack.c.h.b16 %v1930
          %v2102 = vunpack.c.l.b16 %v1931
          %v2103 = vunpack.c.h.b16 %v1931
          %v2104 = vunpack.c.l.b16 %v1932
          %v2105 = vunpack.c.h.b16 %v1932
          %v2106 = vunpack.c.l.b16 %v1933
          %v2107 = vunpack.c.h.b16 %v1933
          %v2108 = vunpack.c.l.b16 %v1934
          %v2109 = vunpack.c.h.b16 %v1934
          %v2110 = vunpack.c.l.b16 %v1935
          %v2111 = vunpack.c.h.b16 %v1935
          %v2112 = vunpack.c.l.b16 %v1936
          %v2113 = vunpack.c.h.b16 %v1936
          %v2114 = vunpack.c.l.b16 %v1937
          %v2115 = vunpack.c.h.b16 %v1937
          %v2116 = vunpack.c.l.b16 %v1938
          %v2117 = vunpack.c.h.b16 %v1938
          %v2118 = vunpack.c.l.b16 %v1939
          %v2119 = vunpack.c.h.b16 %v1939
          %v2120 = vunpack.c.l.b16 %v1940
          %v2121 = vunpack.c.h.b16 %v1940
          %v2122 = vunpack.c.l.b16 %v1941
          %v2123 = vunpack.c.h.b16 %v1941
          %v2124 = vunpack.c.l.b16 %v1942
          %v2125 = vunpack.c.h.b16 %v1942
          %v2126 = vunpack.c.l.b16 %v1943
          %v2127 = vunpack.c.h.b16 %v1943
          %v2128 = vunpack.c.l.b16 %v1944
          %v2129 = vunpack.c.h.b16 %v1944
          %v2130 = vunpack.c.l.b16 %v1945
          %v2131 = vunpack.c.h.b16 %v1945
          %v2132 = vunpack.c.l.b16 %v1946
          %v2133 = vunpack.c.h.b16 %v1946
          %v2134 = vunpack.c.l.b16 %v1947
          %v2135 = vunpack.c.h.b16 %v1947
          %v2136 = vunpack.c.l.b16 %v1948
          %v2137 = vunpack.c.h.b16 %v1948
          %v2138 = vunpack.c.l.b16 %v1949
          %v2139 = vunpack.c.h.b16 %v1949
          %v2140 = vunpack.c.l.b16 %v1950
          %v2141 = vunpack.c.h.b16 %v1950
          %v2142 = vunpack.c.l.b16 %v1951
          %v2143 = vunpack.c.h.b16 %v1951
          %v2144 = vunpack.c.l.b16 %v1952
          %v2145 = vunpack.c.h.b16 %v1952
          %v2146 = vunpack.c.l.b16 %v1953
          %v2147 = vunpack.c.h.b16 %v1953
          %v2148 = vunpack.c.l.b16 %v1954
          %v2149 = vunpack.c.h.b16 %v1954
          %v2150 = vunpack.c.l.b16 %v1955
          %v2151 = vunpack.c.h.b16 %v1955
          %v2152 = vunpack.c.l.b16 %v1956
          %v2153 = vunpack.c.h.b16 %v1956
          %v2154 = vunpack.c.l.b16 %v1957
          %v2155 = vunpack.c.h.b16 %v1957
          %v2156 = vunpack.c.l.b16 %v1958
          %v2157 = vunpack.c.h.b16 %v1958
          %v2158 = vunpack.c.l.b16 %v1959
          %v2159 = vunpack.c.h.b16 %v1959
          %v2160 = vunpack.c.l.b16 %v1960
          %v2161 = vunpack.c.h.b16 %v1960
          %v2162 = vunpack.c.l.b16 %v1961
          %v2163 = vunpack.c.h.b16 %v1961
          %v2164 = vunpack.c.l.b16 %v1962
          %v2165 = vunpack.c.h.b16 %v1962
          %v2166 = vunpack.c.l.b16 %v1963
          %v2167 = vunpack.c.h.b16 %v1963
          %v2168 = vpack.c.b16 %v2042, %v2040
          %v2169 = vpack.c.b16 %v2043, %v2041
          %v2170 = vpack.c.b16 %v2046, %v2044
          %v2171 = vpack.c.b16 %v2047, %v2045
          %v2172 = vpack.c.b16 %v2050, %v2048
          %v2173 = vpack.c.b16 %v2051, %v2049
          %v2174 = vpack.c.b16 %v2054, %v2052
          %v2175 = vpack.c.b16 %v2055, %v2053
          %v2176 = vpack.c.b16 %v2058, %v2056
          %v2177 = vpack.c.b16 %v2059, %v2057
          %v2178 = vpack.c.b16 %v2062, %v2060
          %v2179 = vpack.c.b16 %v2063, %v2061
          %v2180 = vpack.c.b16 %v2066, %v2064
          %v2181 = vpack.c.b16 %v2067, %v2065
          %v2182 = vpack.c.b16 %v2070, %v2068
          %v2183 = vpack.c.b16 %v2071, %v2069
          %v2184 = vpack.c.b16 %v2074, %v2072
          %v2185 = vpack.c.b16 %v2075, %v2073
          %v2186 = vpack.c.b16 %v2078, %v2076
          %v2187 = vpack.c.b16 %v2079, %v2077
          %v2188 = vpack.c.b16 %v2082, %v2080
          %v2189 = vpack.c.b16 %v2083, %v2081
          %v2190 = vpack.c.b16 %v2086, %v2084
          %v2191 = vpack.c.b16 %v2087, %v2085
          %v2192 = vpack.c.b16 %v2090, %v2088
          %v2193 = vpack.c.b16 %v2091, %v2089
          %v2194 = vpack.c.b16 %v2094, %v2092
          %v2195 = vpack.c.b16 %v2095, %v2093
          %v2196 = vpack.c.b16 %v2098, %v2096
          %v2197 = vpack.c.b16 %v2099, %v2097
          %v2198 = vpack.c.b16 %v2102, %v2100
          %v2199 = vpack.c.b16 %v2103, %v2101
          %v2200 = vpack.c.b16 %v2106, %v2104
          %v2201 = vpack.c.b16 %v2107, %v2105
          %v2202 = vpack.c.b16 %v2110, %v2108
          %v2203 = vpack.c.b16 %v2111, %v2109
          %v2204 = vpack.c.b16 %v2114, %v2112
          %v2205 = vpack.c.b16 %v2115, %v2113
          %v2206 = vpack.c.b16 %v2118, %v2116
          %v2207 = vpack.c.b16 %v2119, %v2117
          %v2208 = vpack.c.b16 %v2122, %v2120
          %v2209 = vpack.c.b16 %v2123, %v2121
          %v2210 = vpack.c.b16 %v2126, %v2124
          %v2211 = vpack.c.b16 %v2127, %v2125
          %v2212 = vpack.c.b16 %v2130, %v2128
          %v2213 = vpack.c.b16 %v2131, %v2129
          %v2214 = vpack.c.b16 %v2134, %v2132
          %v2215 = vpack.c.b16 %v2135, %v2133
          %v2216 = vpack.c.b16 %v2138, %v2136
          %v2217 = vpack.c.b16 %v2139, %v2137
          %v2218 = vpack.c.b16 %v2142, %v2140
          %v2219 = vpack.c.b16 %v2143, %v2141
          %v2220 = vpack.c.b16 %v2146, %v2144
          %v2221 = vpack.c.b16 %v2147, %v2145
          %v2222 = vpack.c.b16 %v2150, %v2148
          %v2223 = vpack.c.b16 %v2151, %v2149
          %v2224 = vpack.c.b16 %v2154, %v2152
          %v2225 = vpack.c.b16 %v2155, %v2153
          %v2226 = vpack.c.b16 %v2158, %v2156
          %v2227 = vpack.c.b16 %v2159, %v2157
          %v2228 = vpack.c.b16 %v2162, %v2160
          %v2229 = vpack.c.b16 %v2163, %v2161
          %v2230 = vpack.c.b16 %v2166, %v2164
          %v2231 = vpack.c.b16 %v2167, %v2165
          %2296 = vmatprep.subr.bf16.mxu0 %v2169
          %2297 = vmatpush1.bf16.msra.mxu0 %v2168
          %2298 = vmatprep.subr.bf16.mxu0 %v2171
          %2299 = vmatpush1.bf16.msra.mxu0 %v2170
          %2300 = vmatprep.subr.bf16.mxu0 %v2173
          %2301 = vmatpush1.bf16.msra.mxu0 %v2172
          %2302 = vmatprep.subr.bf16.mxu0 %v2175
          %2303 = vmatpush1.bf16.msra.mxu0 %v2174
          %2304 = vmatprep.subr.bf16.mxu0 %v2177
          %2305 = vmatpush1.bf16.msra.mxu0 %v2176
          %2306 = vmatprep.subr.bf16.mxu0 %v2179
          %2307 = vmatpush1.bf16.msra.mxu0 %v2178
          %2308 = vmatprep.subr.bf16.mxu0 %v2181
          %2309 = vmatpush1.bf16.msra.mxu0 %v2180
          %2310 = vmatprep.subr.bf16.mxu0 %v2183
          %2311 = vmatpush1.bf16.msra.mxu0 %v2182
          %2312 = vmatprep.subr.bf16.mxu0 %v2185
          %2313 = vmatpush1.bf16.msra.mxu0 %v2184
          %2314 = vmatprep.subr.bf16.mxu0 %v2187
          %2315 = vmatpush1.bf16.msra.mxu0 %v2186
          %2316 = vmatprep.subr.bf16.mxu0 %v2189
          %2317 = vmatpush1.bf16.msra.mxu0 %v2188
          %2318 = vmatprep.subr.bf16.mxu0 %v2191
          %2319 = vmatpush1.bf16.msra.mxu0 %v2190
          %2320 = vmatprep.subr.bf16.mxu0 %v2193
          %2321 = vmatpush1.bf16.msra.mxu0 %v2192
          %2322 = vmatprep.subr.bf16.mxu0 %v2195
          %2323 = vmatpush1.bf16.msra.mxu0 %v2194
          %2324 = vmatprep.subr.bf16.mxu0 %v2197
          %2325 = vmatpush1.bf16.msra.mxu0 %v2196
          %2326 = vmatprep.subr.bf16.mxu0 %v2199
          %2327 = vmatpush1.bf16.msra.mxu0 %v2198
          %2328 = vmatprep.mubr.bf16.mxu0 %v1897
          %2329 = vmatmul.mubr.bf16.gmra.mrb[0].mxu0 %v1896
          %v2330 = vpop.f32.mrb[0].mxu0
          %v2331 = vadd.f32 %v1969, %v2330
          %v2332 = vpop.f32.mrb[0].mxu0
          %v2333 = vadd.f32 %v1973, %v2332
          %v2334 = vpop.f32.mrb[0].mxu0
          %v2335 = vpop.f32.mrb[0].mxu0
          %2336 = vdwg.mxu0
          %2337 = vmatprep.subr.bf16.mxu0 %v2201
          %2338 = vmatpush1.bf16.msra.mxu0 %v2200
          %2339 = vmatprep.subr.bf16.mxu0 %v2203
          %2340 = vmatpush1.bf16.msra.mxu0 %v2202
          %2341 = vmatprep.subr.bf16.mxu0 %v2205
          %2342 = vmatpush1.bf16.msra.mxu0 %v2204
          %2343 = vmatprep.subr.bf16.mxu0 %v2207
          %2344 = vmatpush1.bf16.msra.mxu0 %v2206
          %2345 = vmatprep.subr.bf16.mxu0 %v2209
          %2346 = vmatpush1.bf16.msra.mxu0 %v2208
          %2347 = vmatprep.subr.bf16.mxu0 %v2211
          %2348 = vmatpush1.bf16.msra.mxu0 %v2210
          %2349 = vmatprep.subr.bf16.mxu0 %v2213
          %2350 = vmatpush1.bf16.msra.mxu0 %v2212
          %2351 = vmatprep.subr.bf16.mxu0 %v2215
          %2352 = vmatpush1.bf16.msra.mxu0 %v2214
          %2353 = vmatprep.subr.bf16.mxu0 %v2217
          %2354 = vmatpush1.bf16.msra.mxu0 %v2216
          %2355 = vmatprep.subr.bf16.mxu0 %v2219
          %2356 = vmatpush1.bf16.msra.mxu0 %v2218
          %2357 = vmatprep.subr.bf16.mxu0 %v2221
          %2358 = vmatpush1.bf16.msra.mxu0 %v2220
          %2359 = vmatprep.subr.bf16.mxu0 %v2223
          %2360 = vmatpush1.bf16.msra.mxu0 %v2222
          %2361 = vmatprep.subr.bf16.mxu0 %v2225
          %2362 = vmatpush1.bf16.msra.mxu0 %v2224
          %2363 = vmatprep.subr.bf16.mxu0 %v2227
          %2364 = vmatpush1.bf16.msra.mxu0 %v2226
          %2365 = vmatprep.subr.bf16.mxu0 %v2229
          %2366 = vmatpush1.bf16.msra.mxu0 %v2228
          %2367 = vmatprep.subr.bf16.mxu0 %v2231
          %2368 = vmatpush1.bf16.msra.mxu0 %v2230
          %2369 = vmatprep.mubr.bf16.mxu0 %v1899
          %2370 = vmatmul.mubr.bf16.gmra.mrb[0].mxu0 %v1898
          %v2371 = vpop.f32.mrb[0].mxu0
          %v2372 = vadd.f32 %v2331, %v2371
          %v2373 = vpop.f32.mrb[0].mxu0
          %v2374 = vadd.f32 %v2333, %v2373
          %v2375 = vpop.f32.mrb[0].mxu0
          %v2376 = vpop.f32.mrb[0].mxu0
          %2377 = vdwg.mxu0
          %vm2378 = vcmp.gt.f32.partialorder %v2372, 0.0
          %vm2379 = vcmp.gt.f32.partialorder %v2374, 0.0
          %v2380 = vmul.f32 %v2372, 0.2
          %v2381 = vmul.f32 %v2374, 0.2
          %v2382 = vsel %vm2378, %v2372, %v2380
          %v2383 = vsel %vm2379, %v2374, %v2381
          %v2384 = vld [vmem:[#allocation12] sm:$0x3]
          %v2386 = vlaneseq
          %v2387 = vshrl.u32 %v2386, 7
          %v2388 = vsub.s32 0, %v2387
          %v2389 = vrot.slane %v2384, %v2388
          %v2390 = vlaneseq
          %v2391 = vshrl.u32 %v2390, 7
          %v2392 = vsub.s32 1, %v2391
          %v2393 = vrot.slane %v2384, %v2392
          %v2396 = vmul.f32 %v2382, %v2389
          %v2397 = vmul.f32 %v2383, %v2393
          %v2398 = vadd.f32 %v2396, %v2397
          %2399 = vadd.xlane.f32.xlu0 %v2398
          %v2400 = vpop.xlane.xlu0 %2399
          %v2401 = vld [vmem:[#allocation3] sm:$0x1]
          %v2403 = vlaneseq
          %v2404 = vshrl.u32 %v2403, 7
          %v2405 = vsub.s32 0, %v2404
          %v2406 = vrot.slane %v2401, %v2405
          %v2408 = vadd.f32 %v2400, %v2406
          %v2409 = vand.u32 2147483647, %v2408
          %v2410 = vsub.f32 0.0, %v2409
          %v2411 = vmul.f32 %v2410, 1.442695
          %v2412 = vpow.pop %v2411
          %vm2413 = vcmp.ge.f32.partialorder %v2408, 0.0
          %v2414 = vadd.f32 %v2412, 1.0
          %v2415 = vrcp.pop %v2414
          %v2416 = vmul.f32 1.0, %v2415
          %v2417 = vmul.f32 %v2412, %v2415
          %v2418 = vsel %vm2413, %v2416, %v2417
          %vm2419 = vcmask 7168
          %2420 = vst.msk [vmem:[%s407] sm:$0xff] %vm2419, %v2418
        $region80: #{tpu_custom_call.1} parent=47 // pred_fallthru
          _
        %p2421 = scmp.lt.s32.totalorder %s32, 0
        %s2422 = scalar_select %p2421, %s32, 0
        %s2423 = smul.addr %s2422, 8
        %s2424 = scalar_lea.vmem %s7, %s2423
        // Predicated region
        $region81: #{tpu_custom_call.1} parent=47 // pred_check
          %p2425 = pneg %p217
        $region82: #{tpu_custom_call.1} parent=47 // pred_check_branch
          %2427 = sbr.rel (%p2425) target = $region84
        $region83: #{tpu_custom_call.1} parent=47 // pred_region
          _
        $region84: #{tpu_custom_call.1} parent=47 // pred_fallthru
          _
        // Predicated region
        $region85: #{tpu_custom_call.1} parent=47 // pred_check
          %p2428 = pneg %p217
        $region86: #{tpu_custom_call.1} parent=47 // pred_check_branch
          %2430 = sbr.rel (%p2428) target = $region88
        $region87: #{tpu_custom_call.1} parent=47 // pred_region
          %p2431 = scmp.lt.s32.totalorder %s32, 0
          %s2432 = scalar_select %p2431, %s32, 0
          %s2433 = smul.addr %s2432, 8
          %s2434 = scalar_lea.vmem %s7, %s2433
        $region88: #{tpu_custom_call.1} parent=47 // pred_fallthru
          _
      $region48: #{tpu_custom_call.1} parent=5 // pred_fallthru
        _
      %p2435 = scmp.le.s32.totalorder 2, %s23
      // Predicated region
      $region89: #{tpu_custom_call.1} parent=5 // pred_check
        %p2436 = pneg %p2435
      $region90: #{tpu_custom_call.1} parent=5 // pred_check_branch
        %2438 = sbr.rel (%p2436) target = $region92
      $region91: #{tpu_custom_call.1} parent=5 // pred_region
        %s2439 = ssub.s32 %s23, 2
      $region92: #{tpu_custom_call.1} parent=5 // pred_fallthru
        _
    $region6: #{tpu_custom_call.1} parent=1 // loop_footer
      %s27 = sadd.s32 1, %s23
    $region7: #{tpu_custom_call.1} parent=1 // loop_footer_branch
      %22 = sbr.rel target = $region3
    $region8: #{tpu_custom_call.1} parent=1 // loop_exit
      _
    %2440 = vsyncpa [#allocation5], 1
    %s2441 = scalar_lea.sflag [#allocation5], 1
    %2442 = vsyncpa %s2441, 1
    %2443 = vsyncpa [#allocation7], 1
    %s2444 = scalar_lea.sflag [#allocation7], 1
    %2445 = vsyncpa %s2444, 1
    %2446 = vsyncpa [#allocation10], 1
    %2447 = vsyncpa [#allocation13], 1

</llo_original>
